<compile_context>
chip_gen: v6e
topology: v6e:2x2x1
jax: 0.10.0
libtpu: 0.0.40
codegen_flags: <defaults>
</compile_context>

<pallas_src>
import numpy as np

import jax
import jax.numpy as jnp
from jax import lax
from jax.experimental import pallas as pl
from jax.experimental.pallas import tpu as pltpu


# ---------------------------------------------------------------------------
# Fused kernel.  Per grid step it processes TB samples.
#
# Row/col layouts (per block, rows are 2-D matmul M):
#   conv1 LHS  : (TB*16, 48)   rows = (chunk c, sample n, i) with conv row y=4i+c
#                               cols = ky*16 + wx
#   conv1 out  : (TB*16, 256)  cols = wpar*128 + j*16 + co      (w = 2j+wpar)
#   pooled1    : E,O (TB*4,128) rows (n,t): pooled rows 2t / 2t+1, cols j*16+co
#   conv2 LHS  : (TB*8, 384)   rows = [even-out-group ; odd-out-group], K = ky*128+j*16+ci
#   conv2 out  : (TB*8, 32)    cols = w2par*16 + j2*4 + co2
#   pooled2 p2 : (TB*4, 16)    rows (n,i2), cols j2*4 + co2
#   t_conv1 a3 : (TB*4, 256)   cols = py*128 + x*16 + co
#   t_conv2 y  : (TB*4, 64)    cols = r*16 + X   (image row = 4*i2 + r)
# ---------------------------------------------------------------------------
def _autoencoder_kernel(x1_ref, w1c_ref, b1e_ref, w2c_ref, b2e_ref,
                        t1e_ref, b3e_ref, t2e_ref, b4e_ref, out_ref):
    f32 = jnp.float32
    tb4 = x1_ref.shape[1]                       # TB*4

    # ----- conv1 (1->16, 3x3, pad 1) + ReLU: one fused banded matmul -----
    lhs1 = jnp.concatenate(
        [x1_ref[0], x1_ref[1], x1_ref[2], x1_ref[3]], axis=0)   # (TB*16, 48)
    a1 = jnp.dot(lhs1, w1c_ref[...], preferred_element_type=f32) + b1e_ref[...]
    a1 = jnp.maximum(a1, 0.0)                                    # (TB*16, 256)

    # ----- maxpool 2x2 #1: H = max of chunk groups, W = max of lane halves -----
    e_rows = jnp.maximum(a1[0 * tb4:1 * tb4, :], a1[1 * tb4:2 * tb4, :])
    o_rows = jnp.maximum(a1[2 * tb4:3 * tb4, :], a1[3 * tb4:4 * tb4, :])
    E = jnp.maximum(e_rows[:, 0:128], e_rows[:, 128:256])        # pooled rows 0,2,4,6
    O = jnp.maximum(o_rows[:, 0:128], o_rows[:, 128:256])        # pooled rows 1,3,5,7

    # ----- conv2 LHS: gather the 3 vertical taps into K (zero at H borders) -----
    zrow = jnp.zeros((1, 128), f32)
    om = jnp.concatenate([zrow, O[:tb4 - 1, :]], axis=0)         # pooled row 2t-1
    ep = jnp.concatenate([E[1:tb4, :], zrow], axis=0)            # pooled row 2t+2
    ridx = lax.broadcasted_iota(jnp.int32, (tb4, 128), 0) % 4
    om = jnp.where(ridx == 0, 0.0, om)                           # top-of-sample border
    ep = jnp.where(ridx == 3, 0.0, ep)                           # bottom-of-sample border
    lhs_even = jnp.concatenate([om, E, O], axis=1)               # conv2 rows 0,2,4,6
    lhs_odd = jnp.concatenate([E, O, ep], axis=1)                # conv2 rows 1,3,5,7
    lhs2 = jnp.concatenate([lhs_even, lhs_odd], axis=0)          # (TB*8, 384)

    # ----- conv2 (16->4, 3x3, pad 1) + ReLU -----
    a2 = jnp.dot(lhs2, w2c_ref[...], preferred_element_type=f32) + b2e_ref[...]
    a2 = jnp.maximum(a2, 0.0)                                    # (TB*8, 32)

    # ----- maxpool 2x2 #2 -----
    h2 = jnp.maximum(a2[0:tb4, :], a2[tb4:2 * tb4, :])           # H-pool   (TB*4, 32)
    p2 = jnp.maximum(h2[:, 0:16], h2[:, 16:32])                  # W-pool   (TB*4, 16)

    # ----- t_conv1 (4->16, 2x2, stride 2) + ReLU -----
    a3 = jnp.dot(p2, t1e_ref[...], preferred_element_type=f32) + b3e_ref[...]
    a3 = jnp.maximum(a3, 0.0)                                    # (TB*4, 256)

    # ----- t_conv2 (16->1, 2x2, stride 2) + sigmoid (exact) -----
    y = jnp.dot(a3, t2e_ref[...], preferred_element_type=f32) + b4e_ref[...]
    out_ref[...] = 1.0 / (1.0 + jnp.exp(-y))                     # (TB*4, 64)


# ---------------------------------------------------------------------------
# Host/XLA-side weight expansion (tiny, done once per call).
# ---------------------------------------------------------------------------
def _expand_params(p):
    f32 = jnp.float32
    W1 = p["conv1_w"].astype(f32)     # (16, 1, 3, 3)  OIHW
    W2 = p["conv2_w"].astype(f32)     # (4, 16, 3, 3)  OIHW
    T1 = p["tconv1_w"].astype(f32)    # (4, 16, 2, 2)  IOHW
    T2 = p["tconv2_w"].astype(f32)    # (16, 1, 2, 2)  IOHW

    # conv1 banded weight (48, 256): K = ky*16 + wx ; col = wpar*128 + j*16 + co.
    S1 = np.zeros((16, 16, 3), np.float32)
    for w in range(16):
        for kx in range(3):
            wx = w + kx - 1
            if 0 <= wx < 16:
                S1[wx, w, kx] = 1.0
    w1c = jnp.einsum("xwk,cyk->yxwc", jnp.asarray(S1), W1[:, 0])   # (ky,wx,w,co)
    w1c = w1c.reshape(3, 16, 8, 2, 16).transpose(0, 1, 3, 2, 4).reshape(48, 256)

    # conv2 banded weight (384, 32): K = ky*128 + jp*16 + ci ; col = w2par*16 + j2*4 + co2.
    S2 = np.zeros((8, 8, 3), np.float32)
    for w in range(8):
        for kx in range(3):
            jp = w + kx - 1
            if 0 <= jp < 8:
                S2[jp, w, kx] = 1.0
    w2c = jnp.einsum("jwk,oiyk->yjiwo", jnp.asarray(S2), W2)       # (ky,jp,ci,w,co2)
    w2c = w2c.reshape(3, 8, 16, 4, 2, 4).transpose(0, 1, 2, 4, 3, 5).reshape(384, 32)

    # t_conv1 weight (16, 256): K = j2*4 + ci ; col = py*128 + x*16 + co  (x = 2*j2+px).
    Sx1 = np.zeros((4, 2, 8), np.float32)
    for j in range(4):
        for px in range(2):
            Sx1[j, px, 2 * j + px] = 1.0
    t1e = jnp.einsum("jpx,ioyp->jiyxo", jnp.asarray(Sx1), T1).reshape(16, 256)

    # t_conv2 weight (256, 64): K = py*128 + x*16 + co ; col = r*16 + X,
    # with r = 2*py + qy and X = 2*x + qx.
    Sx2 = np.zeros((8, 2, 16), np.float32)
    for x in range(8):
        for qx in range(2):
            Sx2[x, qx, 2 * x + qx] = 1.0
    core = jnp.einsum("xqX,cyq->xcyX", jnp.asarray(Sx2), T2[:, 0])  # (x,co,qy,X)
    Sr = np.zeros((2, 2, 4), np.float32)
    for py in range(2):
        for qy in range(2):
            Sr[py, qy, 2 * py + qy] = 1.0
    t2e = jnp.einsum("pyr,xcyX->pxcrX", jnp.asarray(Sr), core).reshape(256, 64)

    b1e = jnp.tile(p["conv1_b"].astype(f32), 16).reshape(1, 256)
    b2e = jnp.tile(p["conv2_b"].astype(f32), 8).reshape(1, 32)
    b3e = jnp.tile(p["tconv1_b"].astype(f32), 16).reshape(1, 256)
    b4e = jnp.tile(p["tconv2_b"].astype(f32), 64).reshape(1, 64)
    return w1c, b1e, w2c, b2e, t1e, b3e, t2e, b4e


# ---------------------------------------------------------------------------
# Wrapper: input prep (tiny gather), grid over batch blocks, output reshape.
# ---------------------------------------------------------------------------
def conv_autoencoder_forward(x_nchw, params, block_batch=8):
    assert block_batch >= 2 and block_batch % 2 == 0
    n = x_nchw.shape[0]
    tb = block_batch
    n_pad = ((n + tb - 1) // tb) * tb

    x = x_nchw.astype(jnp.float32)[:, 0]                         # (N, 16, 16)
    if n_pad != n:
        x = jnp.pad(x, ((0, n_pad - n), (0, 0), (0, 0)))
    xpad = jnp.pad(x, ((0, 0), (1, 1), (0, 0)))                  # H pad -> (N_pad, 18, 16)

    # conv1 LHS, chunk-major: x1[c, n*4+i, ky*16+w] = xpad[n, 4*i + c + ky, w]
    row_idx = (np.arange(4).reshape(4, 1, 1)            # chunk c
               + 4 * np.arange(4).reshape(1, 4, 1)      # i
               + np.arange(3).reshape(1, 1, 3))         # ky
    x1 = xpad[:, row_idx, :]                                     # (N_pad, 4, 4, 3, 16)
    x1 = x1.transpose(1, 0, 2, 3, 4).reshape(4, n_pad * 4, 48)

    w1c, b1e, w2c, b2e, t1e, b3e, t2e, b4e = _expand_params(params)

    tb4 = tb * 4
    out = pl.pallas_call(
        _autoencoder_kernel,
        out_shape=jax.ShapeDtypeStruct((n_pad * 4, 64), jnp.float32),
        grid=(n_pad // tb,),
        in_specs=[
            pl.BlockSpec((4, tb4, 48), lambda b: (0, b, 0)),
            pl.BlockSpec((48, 256), lambda b: (0, 0)),
            pl.BlockSpec((1, 256), lambda b: (0, 0)),
            pl.BlockSpec((384, 32), lambda b: (0, 0)),
            pl.BlockSpec((1, 32), lambda b: (0, 0)),
            pl.BlockSpec((16, 256), lambda b: (0, 0)),
            pl.BlockSpec((1, 256), lambda b: (0, 0)),
            pl.BlockSpec((256, 64), lambda b: (0, 0)),
            pl.BlockSpec((1, 64), lambda b: (0, 0)),
        ],
        out_specs=pl.BlockSpec((tb4, 64), lambda b: (b, 0)),
        compiler_params=pltpu.CompilerParams(
            dimension_semantics=("parallel",)),
    )(x1, w1c, b1e, w2c, b2e, t1e, b3e, t2e, b4e)

    # (N_pad*4, 64): row (n, i2), col (r, X) -> image row 4*i2 + r, col X.
    y = out.reshape(n_pad, 4, 4, 16).reshape(n_pad, 16, 16)[:n]
    return y.reshape(n, 1, 16, 16)


# ---------------------------------------------------------------------------
# Deterministic parameter init (PyTorch-style uniform(-1/sqrt(fan_in), ...))
# ---------------------------------------------------------------------------
def init_params(key):
    ks = jax.random.split(key, 8)

    def u(k, shape, fan_in):
        bound = 1.0 / float(fan_in) ** 0.5
        return jax.random.uniform(k, shape, jnp.float32, -bound, bound)

    return {
        "conv1_w": u(ks[0], (16, 1, 3, 3), 1 * 9),     # OIHW
        "conv1_b": u(ks[1], (16,), 1 * 9),
        "conv2_w": u(ks[2], (4, 16, 3, 3), 16 * 9),    # OIHW
        "conv2_b": u(ks[3], (4,), 16 * 9),
        "tconv1_w": u(ks[4], (4, 16, 2, 2), 16 * 4),   # IOHW (PyTorch ConvTranspose2d)
        "tconv1_b": u(ks[5], (16,), 16 * 4),
        "tconv2_w": u(ks[6], (16, 1, 2, 2), 1 * 4),    # IOHW
        "tconv2_b": u(ks[7], (1,), 1 * 4),
    }


# ---------------------------------------------------------------------------
# Pure-JAX reference (for the in-script correctness check)
# ---------------------------------------------------------------------------
def reference_forward(x, p):
    dn = ("NCHW", "OIHW", "NCHW")

    def tconv(y, w, b):
        nb, cin, h, wdt = y.shape
        cout = w.shape[1]
        z = jnp.einsum("ncij,cokl->noikjl", y, w)
        return z.reshape(nb, cout, 2 * h, 2 * wdt) + b[None, :, None, None]

    y = jax.lax.conv_general_dilated(x, p["conv1_w"], (1, 1), "SAME",
                                     dimension_numbers=dn)
    y = jax.nn.relu(y + p["conv1_b"][None, :, None, None])
    y = jax.lax.reduce_window(y, -jnp.inf, jax.lax.max, (1, 1, 2, 2),
                              (1, 1, 2, 2), "VALID")
    y = jax.lax.conv_general_dilated(y, p["conv2_w"], (1, 1), "SAME",
                                     dimension_numbers=dn)
    y = jax.nn.relu(y + p["conv2_b"][None, :, None, None])
    y = jax.lax.reduce_window(y, -jnp.inf, jax.lax.max, (1, 1, 2, 2),
                              (1, 1, 2, 2), "VALID")
    y = jax.nn.relu(tconv(y, p["tconv1_w"], p["tconv1_b"]))
    y = jax.nn.sigmoid(tconv(y, p["tconv2_w"], p["tconv2_b"]))
    return y


if __name__ == "__main__":
    key = jax.random.PRNGKey(0)
    k_x, k_p = jax.random.split(key)

    # MNIST-like: 1 channel, 16x16 spatial (divisible by 4 for the two pools).
    # Batch 12 with block_batch=8 exercises batch padding + a 2-step parallel grid.
    x = jax.random.normal(k_x, (12, 1, 16, 16), jnp.float32)
    params = init_params(k_p)

    fwd = jax.jit(conv_autoencoder_forward)
    out = jax.block_until_ready(fwd(x, params))

    assert out.shape == (12, 1, 16, 16), out.shape
    ref = reference_forward(x, params)
    err = float(jnp.max(jnp.abs(out - ref)))
    assert jnp.allclose(out, ref, atol=1e-2, rtol=1e-2), err

    print("KERNEL_OK")
</pallas_src>

<mosaic_0001>
module attributes {stable_mosaic.version = 11 : i64} {
  func.func @_autoencoder_kernel(%arg0: i32, %arg1: memref<4x32x48xf32, #tpu.memory_space<vmem>>, %arg2: memref<48x256xf32, #tpu.memory_space<vmem>>, %arg3: memref<1x256xf32, #tpu.memory_space<vmem>>, %arg4: memref<384x32xf32, #tpu.memory_space<vmem>>, %arg5: memref<1x32xf32, #tpu.memory_space<vmem>>, %arg6: memref<16x256xf32, #tpu.memory_space<vmem>>, %arg7: memref<1x256xf32, #tpu.memory_space<vmem>>, %arg8: memref<256x64xf32, #tpu.memory_space<vmem>>, %arg9: memref<1x64xf32, #tpu.memory_space<vmem>>, %arg10: memref<32x64xf32, #tpu.memory_space<vmem>>) attributes {dimension_semantics = [#tpu.dimension_semantics<parallel>], iteration_bounds = array<i64: 2>, scalar_prefetch = 0 : i64, scratch_operands = 0 : i64, tpu.core_type = #tpu.core_type<tc>, window_params = [{transform_indices = @transform_0, window_bounds = array<i64: 4, 32, 48>}, {pipeline_mode = #tpu.pipeline_mode<synchronous>, transform_indices = @transform_1, window_bounds = array<i64: 48, 256>}, {pipeline_mode = #tpu.pipeline_mode<synchronous>, transform_indices = @transform_2, window_bounds = array<i64: 1, 256>}, {pipeline_mode = #tpu.pipeline_mode<synchronous>, transform_indices = @transform_3, window_bounds = array<i64: 384, 32>}, {pipeline_mode = #tpu.pipeline_mode<synchronous>, transform_indices = @transform_4, window_bounds = array<i64: 1, 32>}, {pipeline_mode = #tpu.pipeline_mode<synchronous>, transform_indices = @transform_5, window_bounds = array<i64: 16, 256>}, {pipeline_mode = #tpu.pipeline_mode<synchronous>, transform_indices = @transform_6, window_bounds = array<i64: 1, 256>}, {pipeline_mode = #tpu.pipeline_mode<synchronous>, transform_indices = @transform_7, window_bounds = array<i64: 256, 64>}, {pipeline_mode = #tpu.pipeline_mode<synchronous>, transform_indices = @transform_8, window_bounds = array<i64: 1, 64>}, {transform_indices = @transform_9, window_bounds = array<i64: 32, 64>}]} {
    %c0 = arith.constant 0 : index
    %c0_0 = arith.constant 0 : index
    %c0_1 = arith.constant 0 : index
    %0 = vector.load %arg1[%c0, %c0_0, %c0_1] : memref<4x32x48xf32, #tpu.memory_space<vmem>>, vector<1x32x48xf32>
    %1 = vector.shape_cast %0 : vector<1x32x48xf32> to vector<32x48xf32>
    %c1 = arith.constant 1 : index
    %c0_2 = arith.constant 0 : index
    %c0_3 = arith.constant 0 : index
    %2 = vector.load %arg1[%c1, %c0_2, %c0_3] : memref<4x32x48xf32, #tpu.memory_space<vmem>>, vector<1x32x48xf32>
    %3 = vector.shape_cast %2 : vector<1x32x48xf32> to vector<32x48xf32>
    %c2 = arith.constant 2 : index
    %c0_4 = arith.constant 0 : index
    %c0_5 = arith.constant 0 : index
    %4 = vector.load %arg1[%c2, %c0_4, %c0_5] : memref<4x32x48xf32, #tpu.memory_space<vmem>>, vector<1x32x48xf32>
    %5 = vector.shape_cast %4 : vector<1x32x48xf32> to vector<32x48xf32>
    %c3 = arith.constant 3 : index
    %c0_6 = arith.constant 0 : index
    %c0_7 = arith.constant 0 : index
    %6 = vector.load %arg1[%c3, %c0_6, %c0_7] : memref<4x32x48xf32, #tpu.memory_space<vmem>>, vector<1x32x48xf32>
    %7 = vector.shape_cast %6 : vector<1x32x48xf32> to vector<32x48xf32>
    %8 = tpu.concatenate %1, %3, %5, %7 in 0 : vector<32x48xf32>, vector<32x48xf32>, vector<32x48xf32>, vector<32x48xf32> -> vector<128x48xf32>
    %c0_8 = arith.constant 0 : index
    %c0_9 = arith.constant 0 : index
    %9 = vector.load %arg2[%c0_8, %c0_9] : memref<48x256xf32, #tpu.memory_space<vmem>>, vector<48x256xf32>
    %cst = arith.constant dense<0.000000e+00> : vector<128x256xf32>
    %10 = tpu.matmul %8, %9, %cst {dimension_numbers = #tpu.dot_dimension_numbers<[1], [0], [0], [1], [0, 0, 1, 1], [], []>} : vector<128x48xf32>, vector<48x256xf32>, vector<128x256xf32> -> vector<128x256xf32>
    %c0_10 = arith.constant 0 : index
    %c0_11 = arith.constant 0 : index
    %11 = vector.load %arg3[%c0_10, %c0_11] : memref<1x256xf32, #tpu.memory_space<vmem>>, vector<1x256xf32>
    %12 = vector.broadcast %11 : vector<1x256xf32> to vector<128x256xf32>
    %13 = arith.addf %10, %12 : vector<128x256xf32>
    %cst_12 = arith.constant 0.000000e+00 : f32
    %14 = vector.broadcast %cst_12 : f32 to vector<128x256xf32>
    %15 = arith.maximumf %13, %14 : vector<128x256xf32>
    %16 = vector.extract_strided_slice %15 {offsets = [0, 0], sizes = [32, 256], strides = [1, 1]} : vector<128x256xf32> to vector<32x256xf32>
    %17 = vector.extract_strided_slice %15 {offsets = [32, 0], sizes = [32, 256], strides = [1, 1]} : vector<128x256xf32> to vector<32x256xf32>
    %18 = arith.maximumf %16, %17 : vector<32x256xf32>
    %19 = vector.extract_strided_slice %15 {offsets = [64, 0], sizes = [32, 256], strides = [1, 1]} : vector<128x256xf32> to vector<32x256xf32>
    %20 = vector.extract_strided_slice %15 {offsets = [96, 0], sizes = [32, 256], strides = [1, 1]} : vector<128x256xf32> to vector<32x256xf32>
    %21 = arith.maximumf %19, %20 : vector<32x256xf32>
    %22 = vector.extract_strided_slice %18 {offsets = [0, 0], sizes = [32, 128], strides = [1, 1]} : vector<32x256xf32> to vector<32x128xf32>
    %23 = vector.extract_strided_slice %18 {offsets = [0, 128], sizes = [32, 128], strides = [1, 1]} : vector<32x256xf32> to vector<32x128xf32>
    %24 = arith.maximumf %22, %23 : vector<32x128xf32>
    %25 = vector.extract_strided_slice %21 {offsets = [0, 0], sizes = [32, 128], strides = [1, 1]} : vector<32x256xf32> to vector<32x128xf32>
    %26 = vector.extract_strided_slice %21 {offsets = [0, 128], sizes = [32, 128], strides = [1, 1]} : vector<32x256xf32> to vector<32x128xf32>
    %27 = arith.maximumf %25, %26 : vector<32x128xf32>
    %cst_13 = arith.constant 0.000000e+00 : f32
    %28 = vector.broadcast %cst_13 : f32 to vector<1x128xf32>
    %29 = vector.extract_strided_slice %27 {offsets = [0, 0], sizes = [31, 128], strides = [1, 1]} : vector<32x128xf32> to vector<31x128xf32>
    %30 = tpu.concatenate %28, %29 in 0 : vector<1x128xf32>, vector<31x128xf32> -> vector<32x128xf32>
    %31 = vector.extract_strided_slice %24 {offsets = [1, 0], sizes = [31, 128], strides = [1, 1]} : vector<32x128xf32> to vector<31x128xf32>
    %32 = tpu.concatenate %31, %28 in 0 : vector<31x128xf32>, vector<1x128xf32> -> vector<32x128xf32>
    %33 = tpu.iota {dimensions = array<i32: 0>} : vector<32x128xi32>
    %c4_i32 = arith.constant 4 : i32
    %c0_i32 = arith.constant 0 : i32
    %34 = arith.cmpi eq, %c4_i32, %c0_i32 : i32
    %c1_i32 = arith.constant 1 : i32
    %35 = arith.select %34, %c1_i32, %c4_i32 : i32
    %36 = vector.broadcast %35 : i32 to vector<32x128xi32>
    %37 = arith.remsi %33, %36 : vector<32x128xi32>
    %c0_i32_14 = arith.constant 0 : i32
    %38 = vector.broadcast %c0_i32_14 : i32 to vector<32x128xi32>
    %39 = arith.cmpi ne, %37, %38 : vector<32x128xi32>
    %c0_i32_15 = arith.constant 0 : i32
    %40 = vector.broadcast %c0_i32_15 : i32 to vector<32x128xi32>
    %41 = arith.cmpi slt, %37, %40 : vector<32x128xi32>
    %c0_i32_16 = arith.constant 0 : i32
    %42 = arith.cmpi slt, %35, %c0_i32_16 : i32
    %43 = vector.broadcast %42 : i1 to vector<32x128xi1>
    %44 = vector.broadcast %43 : vector<32x128xi1> to vector<32x128xi1>
    %45 = arith.xori %41, %44 : vector<32x128xi1>
    %46 = arith.andi %45, %39 : vector<32x128xi1>
    %47 = vector.broadcast %35 : i32 to vector<32x128xi32>
    %48 = arith.addi %37, %47 : vector<32x128xi32>
    %49 = arith.select %46, %48, %37 : vector<32x128xi1>, vector<32x128xi32>
    %c0_i32_17 = arith.constant 0 : i32
    %50 = vector.broadcast %c0_i32_17 : i32 to vector<32x128xi32>
    %51 = arith.cmpi eq, %49, %50 : vector<32x128xi32>
    %cst_18 = arith.constant 0.000000e+00 : f32
    %52 = vector.broadcast %cst_18 : f32 to vector<32x128xf32>
    %53 = arith.select %51, %52, %30 : vector<32x128xi1>, vector<32x128xf32>
    %c3_i32 = arith.constant 3 : i32
    %54 = vector.broadcast %c3_i32 : i32 to vector<32x128xi32>
    %55 = arith.cmpi eq, %49, %54 : vector<32x128xi32>
    %cst_19 = arith.constant 0.000000e+00 : f32
    %56 = vector.broadcast %cst_19 : f32 to vector<32x128xf32>
    %57 = arith.select %55, %56, %32 : vector<32x128xi1>, vector<32x128xf32>
    %58 = tpu.concatenate %53, %24, %27 in 1 : vector<32x128xf32>, vector<32x128xf32>, vector<32x128xf32> -> vector<32x384xf32>
    %59 = tpu.concatenate %24, %27, %57 in 1 : vector<32x128xf32>, vector<32x128xf32>, vector<32x128xf32> -> vector<32x384xf32>
    %60 = tpu.concatenate %58, %59 in 0 : vector<32x384xf32>, vector<32x384xf32> -> vector<64x384xf32>
    %c0_20 = arith.constant 0 : index
    %c0_21 = arith.constant 0 : index
    %61 = vector.load %arg4[%c0_20, %c0_21] : memref<384x32xf32, #tpu.memory_space<vmem>>, vector<384x32xf32>
    %cst_22 = arith.constant dense<0.000000e+00> : vector<64x32xf32>
    %62 = tpu.matmul %60, %61, %cst_22 {dimension_numbers = #tpu.dot_dimension_numbers<[1], [0], [0], [1], [0, 0, 1, 1], [], []>} : vector<64x384xf32>, vector<384x32xf32>, vector<64x32xf32> -> vector<64x32xf32>
    %c0_23 = arith.constant 0 : index
    %c0_24 = arith.constant 0 : index
    %63 = vector.load %arg5[%c0_23, %c0_24] : memref<1x32xf32, #tpu.memory_space<vmem>>, vector<1x32xf32>
    %64 = vector.broadcast %63 : vector<1x32xf32> to vector<64x32xf32>
    %65 = arith.addf %62, %64 : vector<64x32xf32>
    %cst_25 = arith.constant 0.000000e+00 : f32
    %66 = vector.broadcast %cst_25 : f32 to vector<64x32xf32>
    %67 = arith.maximumf %65, %66 : vector<64x32xf32>
    %68 = vector.extract_strided_slice %67 {offsets = [0, 0], sizes = [32, 32], strides = [1, 1]} : vector<64x32xf32> to vector<32x32xf32>
    %69 = vector.extract_strided_slice %67 {offsets = [32, 0], sizes = [32, 32], strides = [1, 1]} : vector<64x32xf32> to vector<32x32xf32>
    %70 = arith.maximumf %68, %69 : vector<32x32xf32>
    %71 = vector.extract_strided_slice %70 {offsets = [0, 0], sizes = [32, 16], strides = [1, 1]} : vector<32x32xf32> to vector<32x16xf32>
    %72 = vector.extract_strided_slice %70 {offsets = [0, 16], sizes = [32, 16], strides = [1, 1]} : vector<32x32xf32> to vector<32x16xf32>
    %73 = arith.maximumf %71, %72 : vector<32x16xf32>
    %c0_26 = arith.constant 0 : index
    %c0_27 = arith.constant 0 : index
    %74 = vector.load %arg6[%c0_26, %c0_27] : memref<16x256xf32, #tpu.memory_space<vmem>>, vector<16x256xf32>
    %cst_28 = arith.constant dense<0.000000e+00> : vector<32x256xf32>
    %75 = tpu.matmul %73, %74, %cst_28 {dimension_numbers = #tpu.dot_dimension_numbers<[1], [0], [0], [1], [0, 0, 1, 1], [], []>} : vector<32x16xf32>, vector<16x256xf32>, vector<32x256xf32> -> vector<32x256xf32>
    %c0_29 = arith.constant 0 : index
    %c0_30 = arith.constant 0 : index
    %76 = vector.load %arg7[%c0_29, %c0_30] : memref<1x256xf32, #tpu.memory_space<vmem>>, vector<1x256xf32>
    %77 = vector.broadcast %76 : vector<1x256xf32> to vector<32x256xf32>
    %78 = arith.addf %75, %77 : vector<32x256xf32>
    %cst_31 = arith.constant 0.000000e+00 : f32
    %79 = vector.broadcast %cst_31 : f32 to vector<32x256xf32>
    %80 = arith.maximumf %78, %79 : vector<32x256xf32>
    %c0_32 = arith.constant 0 : index
    %c0_33 = arith.constant 0 : index
    %81 = vector.load %arg8[%c0_32, %c0_33] : memref<256x64xf32, #tpu.memory_space<vmem>>, vector<256x64xf32>
    %cst_34 = arith.constant dense<0.000000e+00> : vector<32x64xf32>
    %82 = tpu.matmul %80, %81, %cst_34 {dimension_numbers = #tpu.dot_dimension_numbers<[1], [0], [0], [1], [0, 0, 1, 1], [], []>} : vector<32x256xf32>, vector<256x64xf32>, vector<32x64xf32> -> vector<32x64xf32>
    %c0_35 = arith.constant 0 : index
    %c0_36 = arith.constant 0 : index
    %83 = vector.load %arg9[%c0_35, %c0_36] : memref<1x64xf32, #tpu.memory_space<vmem>>, vector<1x64xf32>
    %84 = vector.broadcast %83 : vector<1x64xf32> to vector<32x64xf32>
    %85 = arith.addf %82, %84 : vector<32x64xf32>
    %cst_37 = arith.constant 0.000000e+00 : f32
    %86 = vector.broadcast %cst_37 : f32 to vector<32x64xf32>
    %87 = arith.subf %86, %85 : vector<32x64xf32>
    %88 = math.exp %87 : vector<32x64xf32>
    %cst_38 = arith.constant 1.000000e+00 : f32
    %89 = vector.broadcast %cst_38 : f32 to vector<32x64xf32>
    %90 = arith.addf %89, %88 : vector<32x64xf32>
    %cst_39 = arith.constant 1.000000e+00 : f32
    %91 = vector.broadcast %cst_39 : f32 to vector<32x64xf32>
    %92 = arith.divf %91, %90 : vector<32x64xf32>
    %c0_40 = arith.constant 0 : index
    %c0_41 = arith.constant 0 : index
    %93 = vector.load %arg10[%c0_40, %c0_41] : memref<32x64xf32, #tpu.memory_space<vmem>>, vector<32x64xf32>
    tpu.vector_store %arg10[%c0_40, %c0_41], %92 {strides = array<i32>} : memref<32x64xf32, #tpu.memory_space<vmem>>, vector<32x64xf32>,
    return
  }
  func.func @transform_0(%arg0: i32) -> (i32, i32, i32) {
    %c0_i32 = arith.constant 0 : i32
    %c0_i32_0 = arith.constant 0 : i32
    %c0_i32_1 = arith.constant 0 : i32
    return %c0_i32, %arg0, %c0_i32_0 : i32, i32, i32
  }
  func.func @transform_1(%arg0: i32) -> (i32, i32) {
    %c0_i32 = arith.constant 0 : i32
    %c0_i32_0 = arith.constant 0 : i32
    %c0_i32_1 = arith.constant 0 : i32
    return %c0_i32, %c0_i32_0 : i32, i32
  }
  func.func @transform_2(%arg0: i32) -> (i32, i32) {
    %c0_i32 = arith.constant 0 : i32
    %c0_i32_0 = arith.constant 0 : i32
    %c0_i32_1 = arith.constant 0 : i32
    return %c0_i32, %c0_i32_0 : i32, i32
  }
  func.func @transform_3(%arg0: i32) -> (i32, i32) {
    %c0_i32 = arith.constant 0 : i32
    %c0_i32_0 = arith.constant 0 : i32
    %c0_i32_1 = arith.constant 0 : i32
    return %c0_i32, %c0_i32_0 : i32, i32
  }
  func.func @transform_4(%arg0: i32) -> (i32, i32) {
    %c0_i32 = arith.constant 0 : i32
    %c0_i32_0 = arith.constant 0 : i32
    %c0_i32_1 = arith.constant 0 : i32
    return %c0_i32, %c0_i32_0 : i32, i32
  }
  func.func @transform_5(%arg0: i32) -> (i32, i32) {
    %c0_i32 = arith.constant 0 : i32
    %c0_i32_0 = arith.constant 0 : i32
    %c0_i32_1 = arith.constant 0 : i32
    return %c0_i32, %c0_i32_0 : i32, i32
  }
  func.func @transform_6(%arg0: i32) -> (i32, i32) {
    %c0_i32 = arith.constant 0 : i32
    %c0_i32_0 = arith.constant 0 : i32
    %c0_i32_1 = arith.constant 0 : i32
    return %c0_i32, %c0_i32_0 : i32, i32
  }
  func.func @transform_7(%arg0: i32) -> (i32, i32) {
    %c0_i32 = arith.constant 0 : i32
    %c0_i32_0 = arith.constant 0 : i32
    %c0_i32_1 = arith.constant 0 : i32
    return %c0_i32, %c0_i32_0 : i32, i32
  }
  func.func @transform_8(%arg0: i32) -> (i32, i32) {
    %c0_i32 = arith.constant 0 : i32
    %c0_i32_0 = arith.constant 0 : i32
    %c0_i32_1 = arith.constant 0 : i32
    return %c0_i32, %c0_i32_0 : i32, i32
  }
  func.func @transform_9(%arg0: i32) -> (i32, i32) {
    %c0_i32 = arith.constant 0 : i32
    %c0_i32_0 = arith.constant 0 : i32
    return %arg0, %c0_i32 : i32, i32
  }
}

</mosaic_0001>

<llo_original>
// kernel: tile.23
$region0: #{tile.23}
  #allocation0 [shape = 's32[1]{0}', space=sflag, size = 0x4, scoped, tag = 'scoped memory for tile.23']
  %s0 = inlined_call_operand.vmem [shape: f32[16], index: 0, kind: input, shape index: {}]
  %s1 = inlined_call_operand.vmem [shape: f32[16,16], index: 1, kind: output, shape index: {}]
  // Predicated region
  $region2: #{tile.23} parent=0 // pred_check
    _
  $region3: #{tile.23} parent=0 // pred_check_branch
    %3 = sbr.rel (0) target = $region5
  $region4: #{tile.23} parent=0 // pred_region
    _
  $region5: #{tile.23} parent=0 // pred_fallthru
    _
  %v4 = vld [vmem:[%s0] ss:$0 sm:$0xff]
  %5 = vst [vmem:[%s1] sm:$0xff] %v4
  %s6 = scalar_lea.vmem %s1, 8
  %7 = vst [vmem:[%s6] sm:$0xff] %v4

// kernel: tile.24
$region0: #{tile.24}
  %s0 = inlined_call_operand.vmem [shape: f32[16,16], index: 0, kind: input, shape index: {}]
  %s1 = inlined_call_operand.vmem [shape: f32[1,256], index: 1, kind: output, shape index: {}]
  $region1: #{tile.24} parent=0
    #allocation0 [shape = 'u8[8192]{0}', space=vmem, size = 0x2000, scoped, tag = 'scoped mem for output reshape']
    %s2 = smov 3
    %v3 = vld [vmem:[%s0] ss:$8 sm:%s2]
    %vm4 = vcmask 130048
    %5 = vst.msk [vmem:[#allocation0] ss:$8 sm:$0x3] %vm4, %v3
    %s6 = scalar_lea.vmem %s0, 7
    %s7 = smov 3
    %v8 = vld [vmem:[%s6] ss:$8 sm:%s7]
    %9 = vrot.lane.b32.xlu0 %v8, 112
    %v10 = vpop.permute.xlu0 %9
    %vm11 = vcmask 1048448
    %12 = vst.msk [vmem:[#allocation0] ss:$8 sm:$0x3] %vm11, %v10
    %s13 = scalar_lea.vmem %s0, 6
    %s14 = smov 3
    %v15 = vld [vmem:[%s13] ss:$8 sm:%s14]
    %16 = vrot.lane.b32.xlu0 %v15, 96
    %v17 = vpop.permute.xlu0 %16
    %vm18 = vcmask 917248
    %19 = vst.msk [vmem:[#allocation0] ss:$8 sm:$0x3] %vm18, %v17
    %s20 = scalar_lea.vmem %s0, 5
    %s21 = smov 3
    %v22 = vld [vmem:[%s20] ss:$8 sm:%s21]
    %23 = vrot.lane.b32.xlu0 %v22, 80
    %v24 = vpop.permute.xlu0 %23
    %vm25 = vcmask 786048
    %26 = vst.msk [vmem:[#allocation0] ss:$8 sm:$0x3] %vm25, %v24
    %s27 = scalar_lea.vmem %s0, 4
    %s28 = smov 3
    %v29 = vld [vmem:[%s27] ss:$8 sm:%s28]
    %30 = vrot.lane.b32.xlu0 %v29, 64
    %v31 = vpop.permute.xlu0 %30
    %vm32 = vcmask 654848
    %33 = vst.msk [vmem:[#allocation0] ss:$8 sm:$0x3] %vm32, %v31
    %s34 = scalar_lea.vmem %s0, 3
    %s35 = smov 3
    %v36 = vld [vmem:[%s34] ss:$8 sm:%s35]
    %37 = vrot.lane.b32.xlu0 %v36, 48
    %v38 = vpop.permute.xlu0 %37
    %vm39 = vcmask 523648
    %40 = vst.msk [vmem:[#allocation0] ss:$8 sm:$0x3] %vm39, %v38
    %s41 = scalar_lea.vmem %s0, 2
    %s42 = smov 3
    %v43 = vld [vmem:[%s41] ss:$8 sm:%s42]
    %44 = vrot.lane.b32.xlu0 %v43, 32
    %v45 = vpop.permute.xlu0 %44
    %vm46 = vcmask 392448
    %47 = vst.msk [vmem:[#allocation0] ss:$8 sm:$0x3] %vm46, %v45
    %s48 = scalar_lea.vmem %s0, 1
    %s49 = smov 3
    %v50 = vld [vmem:[%s48] ss:$8 sm:%s49]
    %51 = vrot.lane.b32.xlu0 %v50, 16
    %v52 = vpop.permute.xlu0 %51
    %vm53 = vcmask 261248
    %54 = vst.msk [vmem:[#allocation0] ss:$8 sm:$0x3] %vm53, %v52
    %s56 = sshll.u32 1, 1
    %s57 = ssub.s32 %s56, 1
    %v59 = vld [vmem:[#allocation0] sm:%s57]
    %s60 = sshll.u32 1, 1
    %s61 = ssub.s32 %s60, 1
    %62 = vst [vmem:[%s1] sm:%s61] %v59
    %s63 = scalar_lea.vmem [#allocation0], 8
    %v64 = vld [vmem:[%s63] sm:%s57]
    %s65 = sshll.u32 1, 1
    %s66 = ssub.s32 %s65, 1
    %s67 = scalar_lea.vmem %s1, 1
    %68 = vst [vmem:[%s67] sm:%s66] %v64

// kernel: tile.28
$region0: #{tile.28}
  #allocation0 [shape = 's32[1]{0}', space=sflag, size = 0x4, scoped, tag = 'scoped memory for tile.28']
  %s0 = inlined_call_operand.vmem [shape: f32[4], index: 0, kind: input, shape index: {}]
  %s1 = inlined_call_operand.vmem [shape: f32[8,4], index: 1, kind: output, shape index: {}]
  // Predicated region
  $region2: #{tile.28} parent=0 // pred_check
    _
  $region3: #{tile.28} parent=0 // pred_check_branch
    %3 = sbr.rel (0) target = $region5
  $region4: #{tile.28} parent=0 // pred_region
    _
  $region5: #{tile.28} parent=0 // pred_fallthru
    _
  %v4 = vld [vmem:[%s0] ss:$0 sm:$0xff]
  %5 = vst [vmem:[%s1] sm:$0xff] %v4

// kernel: tile.29
$region0: #{tile.29}
  %s0 = inlined_call_operand.vmem [shape: f32[8,4], index: 0, kind: input, shape index: {}]
  %s1 = inlined_call_operand.vmem [shape: f32[1,32], index: 1, kind: output, shape index: {}]
  $region1: #{tile.29} parent=0
    #allocation0 [shape = 'u8[4096]{0}', space=vmem, size = 0x1000, scoped, tag = 'scoped mem for output reshape']
    %v2 = vld [vmem:[%s0] sm:$0x1]
    %vm3 = vcmask 31744
    %4 = vst.msk [vmem:[#allocation0] sm:$0x1] %vm3, %v2
    %s5 = scalar_lea.vmem %s0, 7
    %v6 = vld [vmem:[%s5] sm:$0x1]
    %7 = vrot.lane.b32.xlu0 %v6, 28
    %v8 = vpop.permute.xlu0 %7
    %vm9 = vcmask 261344
    %10 = vst.msk [vmem:[#allocation0] sm:$0x1] %vm9, %v8
    %s11 = scalar_lea.vmem %s0, 6
    %v12 = vld [vmem:[%s11] sm:$0x1]
    %13 = vrot.lane.b32.xlu0 %v12, 24
    %v14 = vpop.permute.xlu0 %13
    %vm15 = vcmask 228544
    %16 = vst.msk [vmem:[#allocation0] sm:$0x1] %vm15, %v14
    %s17 = scalar_lea.vmem %s0, 5
    %v18 = vld [vmem:[%s17] sm:$0x1]
    %19 = vrot.lane.b32.xlu0 %v18, 20
    %v20 = vpop.permute.xlu0 %19
    %vm21 = vcmask 195744
    %22 = vst.msk [vmem:[#allocation0] sm:$0x1] %vm21, %v20
    %s23 = scalar_lea.vmem %s0, 4
    %v24 = vld [vmem:[%s23] sm:$0x1]
    %25 = vrot.lane.b32.xlu0 %v24, 16
    %v26 = vpop.permute.xlu0 %25
    %vm27 = vcmask 162944
    %28 = vst.msk [vmem:[#allocation0] sm:$0x1] %vm27, %v26
    %s29 = scalar_lea.vmem %s0, 3
    %v30 = vld [vmem:[%s29] sm:$0x1]
    %31 = vrot.lane.b32.xlu0 %v30, 12
    %v32 = vpop.permute.xlu0 %31
    %vm33 = vcmask 130144
    %34 = vst.msk [vmem:[#allocation0] sm:$0x1] %vm33, %v32
    %s35 = scalar_lea.vmem %s0, 2
    %v36 = vld [vmem:[%s35] sm:$0x1]
    %37 = vrot.lane.b32.xlu0 %v36, 8
    %v38 = vpop.permute.xlu0 %37
    %vm39 = vcmask 97344
    %40 = vst.msk [vmem:[#allocation0] sm:$0x1] %vm39, %v38
    %s41 = scalar_lea.vmem %s0, 1
    %v42 = vld [vmem:[%s41] sm:$0x1]
    %43 = vrot.lane.b32.xlu0 %v42, 4
    %v44 = vpop.permute.xlu0 %43
    %vm45 = vcmask 64544
    %46 = vst.msk [vmem:[#allocation0] sm:$0x1] %vm45, %v44
    %s48 = sshll.u32 1, 1
    %s49 = ssub.s32 %s48, 1
    %v51 = vld [vmem:[#allocation0] sm:%s49]
    %s52 = sshll.u32 1, 1
    %s53 = ssub.s32 %s52, 1
    %54 = vst [vmem:[%s1] sm:%s53] %v51

// kernel: conv_autoencoder_forward.1
$region0: #{conv_autoencoder_forward.1}
  #allocation0 [shape = 'u32[]', space=smem, size = 0x4, offset = 0x4, fixed_abs, tag = 'smem constant byte address 0x4 - core index']
  #allocation1 [shape = 'u32[144,128]{1,0:T(1,128)}', space=vmem, size = 0x12000, scoped, tag = 'internal scratch']
  %s0 = inlined_call_operand.vmem [shape: f32[4,64,48], index: 0, kind: input, shape index: {}]
  %s1 = inlined_call_operand.vmem [shape: f32[48,256], index: 1, kind: input, shape index: {}]
  %s2 = inlined_call_operand.vmem [shape: f32[1,256], index: 2, kind: input, shape index: {}]
  %s3 = inlined_call_operand.vmem [shape: f32[384,32], index: 3, kind: input, shape index: {}]
  %s4 = inlined_call_operand.vmem [shape: f32[1,32], index: 4, kind: input, shape index: {}]
  %s5 = inlined_call_operand.vmem [shape: f32[16,256], index: 5, kind: input, shape index: {}]
  %s6 = inlined_call_operand.vmem [shape: f32[1,256], index: 6, kind: input, shape index: {}]
  %s7 = inlined_call_operand.vmem [shape: f32[256,64], index: 7, kind: input, shape index: {}]
  %s8 = inlined_call_operand.vmem [shape: f32[1,64], index: 8, kind: input, shape index: {}]
  %s9 = inlined_call_operand.vmem [shape: f32[64,64], index: 9, kind: output, shape index: {}]
  %s10 = sld [smem:[#allocation0]]
  $region107: #{conv_autoencoder_forward.1} parent=0
    _
  %s12 = ssub.s32 1, %s10
  %s13 = scalar_select 0, %s12, %s10
  $region1: #{conv_autoencoder_forward.1} parent=0
    #allocation2 [shape = 'u8[131072]{0}', space=vmem, size = 0x20000, scoped, tag = 'input window, operand 0']
    loop: start=0, step=1, limit=4
    $region2: #{conv_autoencoder_forward.1} parent=1 // loop_pre_header
      _
    $region3: #{conv_autoencoder_forward.1} parent=1 // loop_header
      %s15 = sphi 0, %s19
      %p16 = scmp.ge.s32.totalorder %s15, 4
      %s25 = sphi 0, %s27
      %s28 = sphi 0, %s25
      %s29 = sphi 0, %s28
      %s45 = sphi 0, %s29
      %s49 = sphi 0, %s49
      %s51 = sphi 0, %s49
      %s52 = sphi 0, %s51
      %s66 = sphi 0, %s52
      %s70 = sphi 0, %s70
      %s72 = sphi 0, %s70
      %s73 = sphi 0, %s72
      %s87 = sphi 0, %s73
      %s91 = sphi 0, %s91
      %s93 = sphi 0, %s91
      %s94 = sphi 0, %s93
      %s108 = sphi 0, %s94
      %s112 = sphi 0, %s112
      %s114 = sphi 0, %s112
      %s115 = sphi 0, %s114
      %s129 = sphi 0, %s115
      %s133 = sphi 0, %s133
      %s135 = sphi 0, %s133
      %s136 = sphi 0, %s135
      %s150 = sphi 0, %s136
      %s154 = sphi 0, %s154
      %s156 = sphi 0, %s154
      %s157 = sphi 0, %s156
      %s171 = sphi 0, %s157
      %s175 = sphi 0, %s175
      %s177 = sphi 0, %s175
      %s178 = sphi 0, %s177
      %s192 = sphi 0, %s178
      %s196 = sphi 0, %s196
      %s198 = sphi 0, %s196
      %s199 = sphi 0, %s198
      %s213 = sphi 0, %s199
      %s219 = sphi 0, %s221
      %s222 = sphi 0, %s219
      %s223 = sphi 0, %s222
      %s239 = sphi 0, %s223
    $region4: #{conv_autoencoder_forward.1} parent=1 // loop_header_branch
      %18 = sbr.rel (%p16) target = $region8
    $region5: #{conv_autoencoder_forward.1} parent=1 // loop_body
      %s20 = ssub.s32 %s15, 1
      %s21 = ssub.s32 %s15, 2
      %s22 = sadd.s32 %s15, 1
      %s23 = ssub.s32 %s15, %s22
      %p24 = scmp.eq.s32.totalorder %s23, 0
      %s26 = sadd.s32 %s25, 1
      %s27 = scalar_select %p24, %s25, %s26
      %p30 = pneg %p24
      %p31 = scmp.eq.s32.totalorder %s15, 1
      %p32 = por %p30, %p31
      %p33 = scmp.ne.s32.totalorder %s25, %s28
      %p34 = scmp.eq.s32.totalorder %s15, 0
      %p35 = por %p33, %p34
      %p36 = scmp.ne.s32.totalorder %s25, %s28
      %p37 = scmp.eq.s32.totalorder %s20, 1
      %p38 = por %p36, %p37
      %p39 = scmp.ne.s32.totalorder %s28, %s29
      %p40 = scmp.eq.s32.totalorder %s20, 0
      %p41 = por %p39, %p40
      %p42 = scmp.ne.s32.totalorder %s28, %s29
      %p43 = scmp.eq.s32.totalorder %s21, 1
      %p44 = por %p42, %p43
      %p46 = scmp.ne.s32.totalorder %s29, %s45
      %p47 = scmp.eq.s32.totalorder %s21, 0
      %p48 = por %p46, %p47
      %s50 = sadd.s32 %s49, 1
      %p53 = scmp.eq.s32.totalorder %s15, 1
      %p54 = scmp.ne.s32.totalorder %s49, %s51
      %p55 = scmp.eq.s32.totalorder %s15, 0
      %p56 = por %p54, %p55
      %p57 = scmp.ne.s32.totalorder %s49, %s51
      %p58 = scmp.eq.s32.totalorder %s20, 1
      %p59 = por %p57, %p58
      %p60 = scmp.ne.s32.totalorder %s51, %s52
      %p61 = scmp.eq.s32.totalorder %s20, 0
      %p62 = por %p60, %p61
      %p63 = scmp.ne.s32.totalorder %s51, %s52
      %p64 = scmp.eq.s32.totalorder %s21, 1
      %p65 = por %p63, %p64
      %p67 = scmp.ne.s32.totalorder %s52, %s66
      %p68 = scmp.eq.s32.totalorder %s21, 0
      %p69 = por %p67, %p68
      %s71 = sadd.s32 %s70, 1
      %p74 = scmp.eq.s32.totalorder %s15, 1
      %p75 = scmp.ne.s32.totalorder %s70, %s72
      %p76 = scmp.eq.s32.totalorder %s15, 0
      %p77 = por %p75, %p76
      %p78 = scmp.ne.s32.totalorder %s70, %s72
      %p79 = scmp.eq.s32.totalorder %s20, 1
      %p80 = por %p78, %p79
      %p81 = scmp.ne.s32.totalorder %s72, %s73
      %p82 = scmp.eq.s32.totalorder %s20, 0
      %p83 = por %p81, %p82
      %p84 = scmp.ne.s32.totalorder %s72, %s73
      %p85 = scmp.eq.s32.totalorder %s21, 1
      %p86 = por %p84, %p85
      %p88 = scmp.ne.s32.totalorder %s73, %s87
      %p89 = scmp.eq.s32.totalorder %s21, 0
      %p90 = por %p88, %p89
      %s92 = sadd.s32 %s91, 1
      %p95 = scmp.eq.s32.totalorder %s15, 1
      %p96 = scmp.ne.s32.totalorder %s91, %s93
      %p97 = scmp.eq.s32.totalorder %s15, 0
      %p98 = por %p96, %p97
      %p99 = scmp.ne.s32.totalorder %s91, %s93
      %p100 = scmp.eq.s32.totalorder %s20, 1
      %p101 = por %p99, %p100
      %p102 = scmp.ne.s32.totalorder %s93, %s94
      %p103 = scmp.eq.s32.totalorder %s20, 0
      %p104 = por %p102, %p103
      %p105 = scmp.ne.s32.totalorder %s93, %s94
      %p106 = scmp.eq.s32.totalorder %s21, 1
      %p107 = por %p105, %p106
      %p109 = scmp.ne.s32.totalorder %s94, %s108
      %p110 = scmp.eq.s32.totalorder %s21, 0
      %p111 = por %p109, %p110
      %s113 = sadd.s32 %s112, 1
      %p116 = scmp.eq.s32.totalorder %s15, 1
      %p117 = scmp.ne.s32.totalorder %s112, %s114
      %p118 = scmp.eq.s32.totalorder %s15, 0
      %p119 = por %p117, %p118
      %p120 = scmp.ne.s32.totalorder %s112, %s114
      %p121 = scmp.eq.s32.totalorder %s20, 1
      %p122 = por %p120, %p121
      %p123 = scmp.ne.s32.totalorder %s114, %s115
      %p124 = scmp.eq.s32.totalorder %s20, 0
      %p125 = por %p123, %p124
      %p126 = scmp.ne.s32.totalorder %s114, %s115
      %p127 = scmp.eq.s32.totalorder %s21, 1
      %p128 = por %p126, %p127
      %p130 = scmp.ne.s32.totalorder %s115, %s129
      %p131 = scmp.eq.s32.totalorder %s21, 0
      %p132 = por %p130, %p131
      %s134 = sadd.s32 %s133, 1
      %p137 = scmp.eq.s32.totalorder %s15, 1
      %p138 = scmp.ne.s32.totalorder %s133, %s135
      %p139 = scmp.eq.s32.totalorder %s15, 0
      %p140 = por %p138, %p139
      %p141 = scmp.ne.s32.totalorder %s133, %s135
      %p142 = scmp.eq.s32.totalorder %s20, 1
      %p143 = por %p141, %p142
      %p144 = scmp.ne.s32.totalorder %s135, %s136
      %p145 = scmp.eq.s32.totalorder %s20, 0
      %p146 = por %p144, %p145
      %p147 = scmp.ne.s32.totalorder %s135, %s136
      %p148 = scmp.eq.s32.totalorder %s21, 1
      %p149 = por %p147, %p148
      %p151 = scmp.ne.s32.totalorder %s136, %s150
      %p152 = scmp.eq.s32.totalorder %s21, 0
      %p153 = por %p151, %p152
      %s155 = sadd.s32 %s154, 1
      %p158 = scmp.eq.s32.totalorder %s15, 1
      %p159 = scmp.ne.s32.totalorder %s154, %s156
      %p160 = scmp.eq.s32.totalorder %s15, 0
      %p161 = por %p159, %p160
      %p162 = scmp.ne.s32.totalorder %s154, %s156
      %p163 = scmp.eq.s32.totalorder %s20, 1
      %p164 = por %p162, %p163
      %p165 = scmp.ne.s32.totalorder %s156, %s157
      %p166 = scmp.eq.s32.totalorder %s20, 0
      %p167 = por %p165, %p166
      %p168 = scmp.ne.s32.totalorder %s156, %s157
      %p169 = scmp.eq.s32.totalorder %s21, 1
      %p170 = por %p168, %p169
      %p172 = scmp.ne.s32.totalorder %s157, %s171
      %p173 = scmp.eq.s32.totalorder %s21, 0
      %p174 = por %p172, %p173
      %s176 = sadd.s32 %s175, 1
      %p179 = scmp.eq.s32.totalorder %s15, 1
      %p180 = scmp.ne.s32.totalorder %s175, %s177
      %p181 = scmp.eq.s32.totalorder %s15, 0
      %p182 = por %p180, %p181
      %p183 = scmp.ne.s32.totalorder %s175, %s177
      %p184 = scmp.eq.s32.totalorder %s20, 1
      %p185 = por %p183, %p184
      %p186 = scmp.ne.s32.totalorder %s177, %s178
      %p187 = scmp.eq.s32.totalorder %s20, 0
      %p188 = por %p186, %p187
      %p189 = scmp.ne.s32.totalorder %s177, %s178
      %p190 = scmp.eq.s32.totalorder %s21, 1
      %p191 = por %p189, %p190
      %p193 = scmp.ne.s32.totalorder %s178, %s192
      %p194 = scmp.eq.s32.totalorder %s21, 0
      %p195 = por %p193, %p194
      %s197 = sadd.s32 %s196, 1
      %p200 = scmp.eq.s32.totalorder %s15, 1
      %p201 = scmp.ne.s32.totalorder %s196, %s198
      %p202 = scmp.eq.s32.totalorder %s15, 0
      %p203 = por %p201, %p202
      %p204 = scmp.ne.s32.totalorder %s196, %s198
      %p205 = scmp.eq.s32.totalorder %s20, 1
      %p206 = por %p204, %p205
      %p207 = scmp.ne.s32.totalorder %s198, %s199
      %p208 = scmp.eq.s32.totalorder %s20, 0
      %p209 = por %p207, %p208
      %p210 = scmp.ne.s32.totalorder %s198, %s199
      %p211 = scmp.eq.s32.totalorder %s21, 1
      %p212 = por %p210, %p211
      %p214 = scmp.ne.s32.totalorder %s199, %s213
      %p215 = scmp.eq.s32.totalorder %s21, 0
      %p216 = por %p214, %p215
      %s217 = ssub.s32 %s15, %s22
      %p218 = scmp.eq.s32.totalorder %s217, 0
      %s220 = sadd.s32 %s219, 1
      %s221 = scalar_select %p218, %s219, %s220
      %p224 = pneg %p218
      %p225 = scmp.eq.s32.totalorder %s15, 1
      %p226 = por %p224, %p225
      %p227 = scmp.ne.s32.totalorder %s219, %s222
      %p228 = scmp.eq.s32.totalorder %s15, 0
      %p229 = por %p227, %p228
      %p230 = scmp.ne.s32.totalorder %s219, %s222
      %p231 = scmp.eq.s32.totalorder %s20, 1
      %p232 = por %p230, %p231
      %p233 = scmp.ne.s32.totalorder %s222, %s223
      %p234 = scmp.eq.s32.totalorder %s20, 0
      %p235 = por %p233, %p234
      %p236 = scmp.ne.s32.totalorder %s222, %s223
      %p237 = scmp.eq.s32.totalorder %s21, 1
      %p238 = por %p236, %p237
      %p240 = scmp.ne.s32.totalorder %s223, %s239
      %p241 = scmp.eq.s32.totalorder %s21, 0
      %p242 = por %p240, %p241
      %p243 = scmp.le.s32.totalorder 1, %s15
      %p244 = scmp.lt.s32.totalorder %s15, 3
      %p245 = pnand %p243, %p244
      %p246 = pneg %p245
      // Predicated region
      $region9: #{conv_autoencoder_forward.1} parent=5 // pred_check
        _
      $region10: #{conv_autoencoder_forward.1} parent=5 // pred_check_branch
        %248 = sbr.rel (%p245) target = $region12
      $region11: #{conv_autoencoder_forward.1} parent=5 // pred_region
        %s249 = ssub.s32 %s15, 1
        // Predicated region
        $region13: #{conv_autoencoder_forward.1} parent=11 // pred_check
          %p250 = pneg %p62
        $region14: #{conv_autoencoder_forward.1} parent=11 // pred_check_branch
          %252 = sbr.rel (%p250) target = $region16
        $region15: #{conv_autoencoder_forward.1} parent=11 // pred_region
          _
        $region16: #{conv_autoencoder_forward.1} parent=11 // pred_fallthru
          _
        // Predicated region
        $region17: #{conv_autoencoder_forward.1} parent=11 // pred_check
          %p253 = pneg %p83
        $region18: #{conv_autoencoder_forward.1} parent=11 // pred_check_branch
          %255 = sbr.rel (%p253) target = $region20
        $region19: #{conv_autoencoder_forward.1} parent=11 // pred_region
          _
        $region20: #{conv_autoencoder_forward.1} parent=11 // pred_fallthru
          _
        // Predicated region
        $region21: #{conv_autoencoder_forward.1} parent=11 // pred_check
          %p256 = pneg %p104
        $region22: #{conv_autoencoder_forward.1} parent=11 // pred_check_branch
          %258 = sbr.rel (%p256) target = $region24
        $region23: #{conv_autoencoder_forward.1} parent=11 // pred_region
          _
        $region24: #{conv_autoencoder_forward.1} parent=11 // pred_fallthru
          _
        // Predicated region
        $region25: #{conv_autoencoder_forward.1} parent=11 // pred_check
          %p259 = pneg %p125
        $region26: #{conv_autoencoder_forward.1} parent=11 // pred_check_branch
          %261 = sbr.rel (%p259) target = $region28
        $region27: #{conv_autoencoder_forward.1} parent=11 // pred_region
          _
        $region28: #{conv_autoencoder_forward.1} parent=11 // pred_fallthru
          _
        // Predicated region
        $region29: #{conv_autoencoder_forward.1} parent=11 // pred_check
          %p262 = pneg %p146
        $region30: #{conv_autoencoder_forward.1} parent=11 // pred_check_branch
          %264 = sbr.rel (%p262) target = $region32
        $region31: #{conv_autoencoder_forward.1} parent=11 // pred_region
          _
        $region32: #{conv_autoencoder_forward.1} parent=11 // pred_fallthru
          _
        // Predicated region
        $region33: #{conv_autoencoder_forward.1} parent=11 // pred_check
          %p265 = pneg %p167
        $region34: #{conv_autoencoder_forward.1} parent=11 // pred_check_branch
          %267 = sbr.rel (%p265) target = $region36
        $region35: #{conv_autoencoder_forward.1} parent=11 // pred_region
          _
        $region36: #{conv_autoencoder_forward.1} parent=11 // pred_fallthru
          _
        // Predicated region
        $region37: #{conv_autoencoder_forward.1} parent=11 // pred_check
          %p268 = pneg %p188
        $region38: #{conv_autoencoder_forward.1} parent=11 // pred_check_branch
          %270 = sbr.rel (%p268) target = $region40
        $region39: #{conv_autoencoder_forward.1} parent=11 // pred_region
          _
        $region40: #{conv_autoencoder_forward.1} parent=11 // pred_fallthru
          _
        // Predicated region
        $region41: #{conv_autoencoder_forward.1} parent=11 // pred_check
          %p271 = pneg %p209
        $region42: #{conv_autoencoder_forward.1} parent=11 // pred_check_branch
          %273 = sbr.rel (%p271) target = $region44
        $region43: #{conv_autoencoder_forward.1} parent=11 // pred_region
          _
        $region44: #{conv_autoencoder_forward.1} parent=11 // pred_fallthru
          _
      $region12: #{conv_autoencoder_forward.1} parent=5 // pred_fallthru
        _
      %p274 = scmp.lt.s32.totalorder %s15, 2
      // Predicated region
      $region45: #{conv_autoencoder_forward.1} parent=5 // pred_check
        %p275 = pneg %p274
      $region46: #{conv_autoencoder_forward.1} parent=5 // pred_check_branch
        %277 = sbr.rel (%p275) target = $region48
      $region47: #{conv_autoencoder_forward.1} parent=5 // pred_region
        // Predicated region
        $region49: #{conv_autoencoder_forward.1} parent=47 // pred_check
          %p278 = pneg %p35
        $region50: #{conv_autoencoder_forward.1} parent=47 // pred_check_branch
          %280 = sbr.rel (%p278) target = $region52
        $region51: #{conv_autoencoder_forward.1} parent=47 // pred_region
          %s281 = sand.u32 %s25, 1
          %s282 = sand.u32 %s25, 1
          %s283 = smul.addr %s282, 128
          %s284 = scalar_lea.vmem [#allocation2], %s283
          %s285 = smul.u32 4, %s15
          %s286 = smul.addr %s285, 8
          %s287 = scalar_lea.vmem %s0, %s286
          // Predicated region
          $region53: #{conv_autoencoder_forward.1} parent=51 // pred_check
            _
          $region54: #{conv_autoencoder_forward.1} parent=51 // pred_check_branch
            %289 = sbr.rel (0) target = $region56
          $region55: #{conv_autoencoder_forward.1} parent=51 // pred_region
            // Predicated region
            $region57: #{conv_autoencoder_forward.1} parent=55 // pred_check
              _
            $region58: #{conv_autoencoder_forward.1} parent=55 // pred_check_branch
              %291 = sbr.rel (0) target = $region60
            $region59: #{conv_autoencoder_forward.1} parent=55 // pred_region
              // Predicated region
              $region72: #{conv_autoencoder_forward.1} parent=59 // pred_check
                _
              $region73: #{conv_autoencoder_forward.1} parent=59 // pred_check_branch
                %337 = sbr.rel (0) target = $region75
              $region74: #{conv_autoencoder_forward.1} parent=59 // pred_region
                loop: start=0, step=1, limit=1
                $region76: #{conv_autoencoder_forward.1} parent=74 // loop_pre_header
                  _
                $region77: #{conv_autoencoder_forward.1} parent=74 // loop_header
                  %s339 = sphi 0, %s343
                  %p340 = scmp.ge.s32.totalorder %s339, 1
                  %s344 = sphi %s287, %s287
                  %s345 = sphi %s284, %s284
                $region78: #{conv_autoencoder_forward.1} parent=74 // loop_header_branch
                  %342 = sbr.rel (%p340) target = $region82
                $region79: #{conv_autoencoder_forward.1} parent=74 // loop_body
                  %v346 = vld [vmem:[%s344] sm:$0xff]
                  %347 = vst [vmem:[%s345] sm:$0xff] %v346
                  %v348 = vld [vmem:[%s344 + $0x8] sm:$0xff]
                  %349 = vst [vmem:[%s345 + $0x8] sm:$0xff] %v348
                  %v350 = vld [vmem:[%s344 + $0x10] sm:$0xff]
                  %351 = vst [vmem:[%s345 + $0x10] sm:$0xff] %v350
                  %v352 = vld [vmem:[%s344 + $0x18] sm:$0xff]
                  %353 = vst [vmem:[%s345 + $0x18] sm:$0xff] %v352
                  %v354 = vld [vmem:[%s344 + $0x40] sm:$0xff]
                  %355 = vst [vmem:[%s345 + $0x20] sm:$0xff] %v354
                  %v356 = vld [vmem:[%s344 + $0x48] sm:$0xff]
                  %357 = vst [vmem:[%s345 + $0x28] sm:$0xff] %v356
                  %v358 = vld [vmem:[%s344 + $0x50] sm:$0xff]
                  %359 = vst [vmem:[%s345 + $0x30] sm:$0xff] %v358
                  %v360 = vld [vmem:[%s344 + $0x58] sm:$0xff]
                  %361 = vst [vmem:[%s345 + $0x38] sm:$0xff] %v360
                  %v362 = vld [vmem:[%s344 + $0x80] sm:$0xff]
                  %363 = vst [vmem:[%s345 + $0x40] sm:$0xff] %v362
                  %v364 = vld [vmem:[%s344 + $0x88] sm:$0xff]
                  %365 = vst [vmem:[%s345 + $0x48] sm:$0xff] %v364
                  %v366 = vld [vmem:[%s344 + $0x90] sm:$0xff]
                  %367 = vst [vmem:[%s345 + $0x50] sm:$0xff] %v366
                  %v368 = vld [vmem:[%s344 + $0x98] sm:$0xff]
                  %369 = vst [vmem:[%s345 + $0x58] sm:$0xff] %v368
                  %v370 = vld [vmem:[%s344 + $0xc0] sm:$0xff]
                  %371 = vst [vmem:[%s345 + $0x60] sm:$0xff] %v370
                  %v372 = vld [vmem:[%s344 + $0xc8] sm:$0xff]
                  %373 = vst [vmem:[%s345 + $0x68] sm:$0xff] %v372
                  %v374 = vld [vmem:[%s344 + $0xd0] sm:$0xff]
                  %375 = vst [vmem:[%s345 + $0x70] sm:$0xff] %v374
                  %v376 = vld [vmem:[%s344 + $0xd8] sm:$0xff]
                  %377 = vst [vmem:[%s345 + $0x78] sm:$0xff] %v376
                $region80: #{conv_autoencoder_forward.1} parent=74 // loop_footer
                  %s343 = sadd.s32 1, %s339
                $region81: #{conv_autoencoder_forward.1} parent=74 // loop_footer_branch
                  %338 = sbr.rel target = $region77
                $region82: #{conv_autoencoder_forward.1} parent=74 // loop_exit
                  _
              $region75: #{conv_autoencoder_forward.1} parent=59 // pred_fallthru
                _
              // Predicated region
              $region83: #{conv_autoencoder_forward.1} parent=59 // pred_check
                _
              $region84: #{conv_autoencoder_forward.1} parent=59 // pred_check_branch
                %379 = sbr.rel target = $region86
              $region85: #{conv_autoencoder_forward.1} parent=59 // pred_region
                _
              $region86: #{conv_autoencoder_forward.1} parent=59 // pred_fallthru
                _
            $region60: #{conv_autoencoder_forward.1} parent=55 // pred_fallthru
              _
            // Predicated region
            $region61: #{conv_autoencoder_forward.1} parent=55 // pred_check
              _
            $region62: #{conv_autoencoder_forward.1} parent=55 // pred_check_branch
              %293 = sbr.rel target = $region64
            $region63: #{conv_autoencoder_forward.1} parent=55 // pred_region
              %s295 = ssub.s32 256, 1
              loop: start=0, step=1, limit=1
              $region65: #{conv_autoencoder_forward.1} parent=63 // loop_pre_header
                _
              $region66: #{conv_autoencoder_forward.1} parent=63 // loop_header
                %s297 = sphi 0, %s301
                %p298 = scmp.ge.s32.totalorder %s297, 1
                %s302 = sphi %s287, %s287
                %s303 = sphi %s284, %s284
              $region67: #{conv_autoencoder_forward.1} parent=63 // loop_header_branch
                %300 = sbr.rel (%p298) target = $region71
              $region68: #{conv_autoencoder_forward.1} parent=63 // loop_body
                %v304 = vld [vmem:[%s302] sm:%s295]
                %305 = vst [vmem:[%s303] sm:%s295] %v304
                %v306 = vld [vmem:[%s302 + $0x8] sm:%s295]
                %307 = vst [vmem:[%s303 + $0x8] sm:%s295] %v306
                %v308 = vld [vmem:[%s302 + $0x10] sm:%s295]
                %309 = vst [vmem:[%s303 + $0x10] sm:%s295] %v308
                %v310 = vld [vmem:[%s302 + $0x18] sm:%s295]
                %311 = vst [vmem:[%s303 + $0x18] sm:%s295] %v310
                %v312 = vld [vmem:[%s302 + $0x40] sm:%s295]
                %313 = vst [vmem:[%s303 + $0x20] sm:%s295] %v312
                %v314 = vld [vmem:[%s302 + $0x48] sm:%s295]
                %315 = vst [vmem:[%s303 + $0x28] sm:%s295] %v314
                %v316 = vld [vmem:[%s302 + $0x50] sm:%s295]
                %317 = vst [vmem:[%s303 + $0x30] sm:%s295] %v316
                %v318 = vld [vmem:[%s302 + $0x58] sm:%s295]
                %319 = vst [vmem:[%s303 + $0x38] sm:%s295] %v318
                %v320 = vld [vmem:[%s302 + $0x80] sm:%s295]
                %321 = vst [vmem:[%s303 + $0x40] sm:%s295] %v320
                %v322 = vld [vmem:[%s302 + $0x88] sm:%s295]
                %323 = vst [vmem:[%s303 + $0x48] sm:%s295] %v322
                %v324 = vld [vmem:[%s302 + $0x90] sm:%s295]
                %325 = vst [vmem:[%s303 + $0x50] sm:%s295] %v324
                %v326 = vld [vmem:[%s302 + $0x98] sm:%s295]
                %327 = vst [vmem:[%s303 + $0x58] sm:%s295] %v326
                %v328 = vld [vmem:[%s302 + $0xc0] sm:%s295]
                %329 = vst [vmem:[%s303 + $0x60] sm:%s295] %v328
                %v330 = vld [vmem:[%s302 + $0xc8] sm:%s295]
                %331 = vst [vmem:[%s303 + $0x68] sm:%s295] %v330
                %v332 = vld [vmem:[%s302 + $0xd0] sm:%s295]
                %333 = vst [vmem:[%s303 + $0x70] sm:%s295] %v332
                %v334 = vld [vmem:[%s302 + $0xd8] sm:%s295]
                %335 = vst [vmem:[%s303 + $0x78] sm:%s295] %v334
              $region69: #{conv_autoencoder_forward.1} parent=63 // loop_footer
                %s301 = sadd.s32 1, %s297
              $region70: #{conv_autoencoder_forward.1} parent=63 // loop_footer_branch
                %296 = sbr.rel target = $region66
              $region71: #{conv_autoencoder_forward.1} parent=63 // loop_exit
                _
            $region64: #{conv_autoencoder_forward.1} parent=55 // pred_fallthru
              _
          $region56: #{conv_autoencoder_forward.1} parent=51 // pred_fallthru
            _
          %380 = vnop
        $region52: #{conv_autoencoder_forward.1} parent=47 // pred_fallthru
          _
      $region48: #{conv_autoencoder_forward.1} parent=5 // pred_fallthru
        _
      %p381 = scmp.le.s32.totalorder 1, %s15
      %p382 = scmp.lt.s32.totalorder %s15, 3
      %p383 = pnand %p381, %p382
      %p384 = pneg %p383
      // Predicated region
      $region87: #{conv_autoencoder_forward.1} parent=5 // pred_check
        _
      $region88: #{conv_autoencoder_forward.1} parent=5 // pred_check_branch
        %386 = sbr.rel (%p383) target = $region90
      $region89: #{conv_autoencoder_forward.1} parent=5 // pred_region
        %s387 = ssub.s32 %s15, 1
        %s388 = sand.u32 %s28, 1
        %s389 = sand.u32 %s28, 1
        %s390 = smul.addr %s389, 128
        %s391 = scalar_lea.vmem [#allocation2], %s390
        // Predicated region
        $region91: #{conv_autoencoder_forward.1} parent=89 // pred_check
          %p392 = pneg %p41
        $region92: #{conv_autoencoder_forward.1} parent=89 // pred_check_branch
          %394 = sbr.rel (%p392) target = $region94
        $region93: #{conv_autoencoder_forward.1} parent=89 // pred_region
          _
        $region94: #{conv_autoencoder_forward.1} parent=89 // pred_fallthru
          _
        %s395 = sand.u32 %s28, 1
        %s396 = sand.u32 %s28, 1
        %s397 = smul.addr %s396, 128
        %s398 = scalar_lea.vmem [#allocation2], %s397
        %p399 = pneg %p41
        %p400 = pneg %p38
        %p401 = pneg %p62
        %p402 = pneg %p59
        %p403 = pneg %p83
        %p404 = pneg %p80
        %p405 = pneg %p104
        %p406 = pneg %p101
        %p407 = pneg %p125
        %p408 = pneg %p122
        %p409 = pneg %p146
        %p410 = pneg %p143
        %p411 = pneg %p167
        %p412 = pneg %p164
        %p413 = pneg %p188
        %p414 = pneg %p185
        %p415 = pneg %p209
        %p416 = pneg %p206
        %p417 = pneg %p235
        %p418 = pneg %p232
        %s419 = smul.u32 4, %s20
        %p420 = scmp.lt.s32.totalorder %s419, 7
        %s421 = scalar_select %p420, %s419, 7
        %s422 = smul.addr %s421, 8
        %s423 = scalar_lea.vmem %s9, %s422
        %s424 = smul.u32 4, %s20
        %s425 = smul.u32 4, %s20
        %p426 = scmp.lt.s32.totalorder %s425, 7
        %s427 = scalar_select %p426, %s425, 7
        %s428 = smul.addr %s427, 8
        %s429 = scalar_lea.vmem %s9, %s428
        %s430 = smul.u32 4, %s20
        %v431 = vld [vmem:[%s391] sm:$0xff]
        %v432 = vld [vmem:[%s391 + $0x8] sm:$0xff]
        %v433 = vld [vmem:[%s391 + $0x10] sm:$0xff]
        %v434 = vld [vmem:[%s391 + $0x18] sm:$0xff]
        %s435 = scalar_lea.vmem %s391, 32 [#allocation2]
        %v436 = vld [vmem:[%s435] sm:$0xff]
        %v437 = vld [vmem:[%s435 + $0x8] sm:$0xff]
        %v438 = vld [vmem:[%s435 + $0x10] sm:$0xff]
        %v439 = vld [vmem:[%s435 + $0x18] sm:$0xff]
        %s440 = scalar_lea.vmem %s391, 64 [#allocation2]
        %v441 = vld [vmem:[%s440] sm:$0xff]
        %v442 = vld [vmem:[%s440 + $0x8] sm:$0xff]
        %v443 = vld [vmem:[%s440 + $0x10] sm:$0xff]
        %v444 = vld [vmem:[%s440 + $0x18] sm:$0xff]
        %s445 = scalar_lea.vmem %s391, 96 [#allocation2]
        %v446 = vld [vmem:[%s445] sm:$0xff]
        %v447 = vld [vmem:[%s445 + $0x8] sm:$0xff]
        %v448 = vld [vmem:[%s445 + $0x10] sm:$0xff]
        %v449 = vld [vmem:[%s445 + $0x18] sm:$0xff]
        %v450 = vld [vmem:[%s1] sm:$0xff]
        %v451 = vld [vmem:[%s1 + $0x8] sm:$0xff]
        %v452 = vld [vmem:[%s1 + $0x10] sm:$0xff]
        %v453 = vld [vmem:[%s1 + $0x18] sm:$0xff]
        %v454 = vld [vmem:[%s1 + $0x20] sm:$0xff]
        %v455 = vld [vmem:[%s1 + $0x28] sm:$0xff]
        %v456 = vld [vmem:[%s1 + $0x30] sm:$0xff]
        %v457 = vld [vmem:[%s1 + $0x38] sm:$0xff]
        %v458 = vld [vmem:[%s1 + $0x40] sm:$0xff]
        %v459 = vld [vmem:[%s1 + $0x48] sm:$0xff]
        %v460 = vld [vmem:[%s1 + $0x50] sm:$0xff]
        %v461 = vld [vmem:[%s1 + $0x58] sm:$0xff]
        %v462 = vld [vmem:[%s2] sm:$0x3]
        %v464 = vlaneseq
        %v465 = vshrl.u32 %v464, 7
        %v466 = vsub.s32 0, %v465
        %v467 = vrot.slane %v462, %v466
        %v468 = vlaneseq
        %v469 = vshrl.u32 %v468, 7
        %v470 = vsub.s32 1, %v469
        %v471 = vrot.slane %v462, %v470
        %vm474 = vcmask 392192
        %v476 = vsel %vm474, %v431, 0
        %v479 = vsel %vm474, %v432, 0
        %v482 = vsel %vm474, %v433, 0
        %v485 = vsel %vm474, %v434, 0
        %v488 = vsel %vm474, %v436, 0
        %v491 = vsel %vm474, %v437, 0
        %v494 = vsel %vm474, %v438, 0
        %v497 = vsel %vm474, %v439, 0
        %v500 = vsel %vm474, %v441, 0
        %v503 = vsel %vm474, %v442, 0
        %v506 = vsel %vm474, %v443, 0
        %v509 = vsel %vm474, %v444, 0
        %v512 = vsel %vm474, %v446, 0
        %v515 = vsel %vm474, %v447, 0
        %v518 = vsel %vm474, %v448, 0
        %v521 = vsel %vm474, %v449, 0
        %523 = vmatprep.subr.mxu0 0.0
        %524 = vmatpush1.msra.mxu0 0.0
        %525 = vmatprep.subr.mxu0 0.0
        %526 = vmatpush1.msra.mxu0 0.0
        %527 = vmatprep.subr.mxu0 0.0
        %528 = vmatpush1.msra.mxu0 0.0
        %529 = vmatprep.subr.mxu0 0.0
        %530 = vmatpush1.msra.mxu0 0.0
        %531 = vmatprep.subr.mxu0 0.0
        %532 = vmatpush1.msra.mxu0 0.0
        %533 = vmatprep.subr.mxu0 0.0
        %534 = vmatpush1.msra.mxu0 0.0
        %535 = vmatprep.subr.mxu0 0.0
        %536 = vmatpush1.msra.mxu0 0.0
        %537 = vmatprep.subr.mxu0 0.0
        %538 = vmatpush1.msra.mxu0 0.0
        %539 = vmatprep.subr.mxu0 0.0
        %540 = vmatpush1.msra.mxu0 0.0
        %541 = vmatprep.subr.mxu0 0.0
        %542 = vmatpush1.msra.mxu0 0.0
        %543 = vmatprep.subr.mxu0 %v461
        %544 = vmatpush1.msra.mxu0 %v460
        %545 = vmatprep.subr.mxu0 %v459
        %546 = vmatpush1.msra.mxu0 %v458
        %547 = vmatprep.subr.mxu0 %v457
        %548 = vmatpush1.msra.mxu0 %v456
        %549 = vmatprep.subr.mxu0 %v455
        %550 = vmatpush1.msra.mxu0 %v454
        %551 = vmatprep.subr.mxu0 %v453
        %552 = vmatpush1.msra.mxu0 %v452
        %553 = vmatprep.subr.mxu0 %v451
        %554 = vmatpush1.msra.mxu0 %v450
        %555 = vmatprep.subr.mxu0 0.0
        %556 = vmatpush2.msra.mxu0 0.0
        %557 = vmatprep.subr.mxu0 0.0
        %558 = vmatpush2.msra.mxu0 0.0
        %559 = vmatprep.subr.mxu0 0.0
        %560 = vmatpush2.msra.mxu0 0.0
        %561 = vmatprep.subr.mxu0 0.0
        %562 = vmatpush2.msra.mxu0 0.0
        %563 = vmatprep.subr.mxu0 0.0
        %564 = vmatpush2.msra.mxu0 0.0
        %565 = vmatprep.subr.mxu0 0.0
        %566 = vmatpush2.msra.mxu0 0.0
        %567 = vmatprep.subr.mxu0 0.0
        %568 = vmatpush2.msra.mxu0 0.0
        %569 = vmatprep.subr.mxu0 0.0
        %570 = vmatpush2.msra.mxu0 0.0
        %571 = vmatprep.subr.mxu0 0.0
        %572 = vmatpush2.msra.mxu0 0.0
        %573 = vmatprep.subr.mxu0 0.0
        %574 = vmatpush2.msra.mxu0 0.0
        %575 = vmatprep.subr.mxu0 0.0
        %576 = vmatpush2.msra.mxu0 0.0
        %577 = vmatprep.subr.mxu0 0.0
        %578 = vmatpush2.msra.mxu0 0.0
        %579 = vmatprep.subr.mxu0 0.0
        %580 = vmatpush2.msra.mxu0 0.0
        %581 = vmatprep.subr.mxu0 0.0
        %582 = vmatpush2.msra.mxu0 0.0
        %583 = vmatprep.subr.mxu0 0.0
        %584 = vmatpush2.msra.mxu0 0.0
        %585 = vmatprep.subr.mxu0 0.0
        %586 = vmatpush2.msra.mxu0 0.0
        %587 = vmatprep.mubr.f32.mxu0 0.0
        %588 = vmatmul.mubr.f32.gmra.mxu0 %v476
        %v589 = vpop.f32.mrf.mxu0
        %v590 = vadd.f32 %v467, %v589
        %v591 = vpop.f32.mrf.mxu0
        %v592 = vadd.f32 %v471, %v591
        %593 = vmatprep.mubr.f32.mxu0 0.0
        %594 = vmatmul.mubr.f32.gmra.mxu0 %v479
        %v595 = vpop.f32.mrf.mxu0
        %v596 = vadd.f32 %v467, %v595
        %v597 = vpop.f32.mrf.mxu0
        %v598 = vadd.f32 %v471, %v597
        %599 = vmatprep.mubr.f32.mxu0 0.0
        %600 = vmatmul.mubr.f32.gmra.mxu0 %v482
        %v601 = vpop.f32.mrf.mxu0
        %v602 = vadd.f32 %v467, %v601
        %v603 = vpop.f32.mrf.mxu0
        %v604 = vadd.f32 %v471, %v603
        %605 = vmatprep.mubr.f32.mxu0 0.0
        %606 = vmatmul.mubr.f32.gmra.mxu0 %v485
        %v607 = vpop.f32.mrf.mxu0
        %v608 = vadd.f32 %v467, %v607
        %v609 = vpop.f32.mrf.mxu0
        %v610 = vadd.f32 %v471, %v609
        %611 = vmatprep.mubr.f32.mxu0 0.0
        %612 = vmatmul.mubr.f32.gmra.mxu0 %v488
        %v613 = vpop.f32.mrf.mxu0
        %v614 = vadd.f32 %v467, %v613
        %v615 = vpop.f32.mrf.mxu0
        %v616 = vadd.f32 %v471, %v615
        %617 = vmatprep.mubr.f32.mxu0 0.0
        %618 = vmatmul.mubr.f32.gmra.mxu0 %v491
        %v619 = vpop.f32.mrf.mxu0
        %v620 = vadd.f32 %v467, %v619
        %v621 = vpop.f32.mrf.mxu0
        %v622 = vadd.f32 %v471, %v621
        %623 = vmatprep.mubr.f32.mxu0 0.0
        %624 = vmatmul.mubr.f32.gmra.mxu0 %v494
        %v625 = vpop.f32.mrf.mxu0
        %v626 = vadd.f32 %v467, %v625
        %v627 = vpop.f32.mrf.mxu0
        %v628 = vadd.f32 %v471, %v627
        %629 = vmatprep.mubr.f32.mxu0 0.0
        %630 = vmatmul.mubr.f32.gmra.mxu0 %v497
        %v631 = vpop.f32.mrf.mxu0
        %v632 = vadd.f32 %v467, %v631
        %v633 = vpop.f32.mrf.mxu0
        %v634 = vadd.f32 %v471, %v633
        %635 = vmatprep.mubr.f32.mxu0 0.0
        %636 = vmatmul.mubr.f32.gmra.mxu0 %v500
        %v637 = vpop.f32.mrf.mxu0
        %v638 = vadd.f32 %v467, %v637
        %v639 = vpop.f32.mrf.mxu0
        %v640 = vadd.f32 %v471, %v639
        %641 = vmatprep.mubr.f32.mxu0 0.0
        %642 = vmatmul.mubr.f32.gmra.mxu0 %v503
        %v643 = vpop.f32.mrf.mxu0
        %v644 = vadd.f32 %v467, %v643
        %v645 = vpop.f32.mrf.mxu0
        %v646 = vadd.f32 %v471, %v645
        %647 = vmatprep.mubr.f32.mxu0 0.0
        %648 = vmatmul.mubr.f32.gmra.mxu0 %v506
        %v649 = vpop.f32.mrf.mxu0
        %v650 = vadd.f32 %v467, %v649
        %v651 = vpop.f32.mrf.mxu0
        %v652 = vadd.f32 %v471, %v651
        %653 = vmatprep.mubr.f32.mxu0 0.0
        %654 = vmatmul.mubr.f32.gmra.mxu0 %v509
        %v655 = vpop.f32.mrf.mxu0
        %v656 = vadd.f32 %v467, %v655
        %v657 = vpop.f32.mrf.mxu0
        %v658 = vadd.f32 %v471, %v657
        %659 = vmatprep.mubr.f32.mxu0 0.0
        %660 = vmatmul.mubr.f32.gmra.mxu0 %v512
        %v661 = vpop.f32.mrf.mxu0
        %v662 = vadd.f32 %v467, %v661
        %v663 = vpop.f32.mrf.mxu0
        %v664 = vadd.f32 %v471, %v663
        %665 = vmatprep.mubr.f32.mxu0 0.0
        %666 = vmatmul.mubr.f32.gmra.mxu0 %v515
        %v667 = vpop.f32.mrf.mxu0
        %v668 = vadd.f32 %v467, %v667
        %v669 = vpop.f32.mrf.mxu0
        %v670 = vadd.f32 %v471, %v669
        %671 = vmatprep.mubr.f32.mxu0 0.0
        %672 = vmatmul.mubr.f32.gmra.mxu0 %v518
        %v673 = vpop.f32.mrf.mxu0
        %v674 = vadd.f32 %v467, %v673
        %v675 = vpop.f32.mrf.mxu0
        %v676 = vadd.f32 %v471, %v675
        %677 = vmatprep.mubr.f32.mxu0 0.0
        %678 = vmatmul.mubr.f32.gmra.mxu0 %v521
        %v679 = vpop.f32.mrf.mxu0
        %v680 = vadd.f32 %v467, %v679
        %v681 = vpop.f32.mrf.mxu0
        %v682 = vadd.f32 %v471, %v681
        %683 = vdwg.mxu0
        %v684 = vmax.f32 %v590, 0.0
        %v685 = vmax.f32 %v592, 0.0
        %v686 = vmax.f32 %v596, 0.0
        %v687 = vmax.f32 %v598, 0.0
        %v688 = vmax.f32 %v602, 0.0
        %v689 = vmax.f32 %v604, 0.0
        %v690 = vmax.f32 %v608, 0.0
        %v691 = vmax.f32 %v610, 0.0
        %v692 = vmax.f32 %v614, 0.0
        %v693 = vmax.f32 %v616, 0.0
        %v694 = vmax.f32 %v620, 0.0
        %v695 = vmax.f32 %v622, 0.0
        %v696 = vmax.f32 %v626, 0.0
        %v697 = vmax.f32 %v628, 0.0
        %v698 = vmax.f32 %v632, 0.0
        %v699 = vmax.f32 %v634, 0.0
        %v700 = vmax.f32 %v638, 0.0
        %v701 = vmax.f32 %v640, 0.0
        %v702 = vmax.f32 %v644, 0.0
        %v703 = vmax.f32 %v646, 0.0
        %v704 = vmax.f32 %v650, 0.0
        %v705 = vmax.f32 %v652, 0.0
        %v706 = vmax.f32 %v656, 0.0
        %v707 = vmax.f32 %v658, 0.0
        %v708 = vmax.f32 %v662, 0.0
        %v709 = vmax.f32 %v664, 0.0
        %v710 = vmax.f32 %v668, 0.0
        %v711 = vmax.f32 %v670, 0.0
        %v712 = vmax.f32 %v674, 0.0
        %v713 = vmax.f32 %v676, 0.0
        %v714 = vmax.f32 %v680, 0.0
        %v715 = vmax.f32 %v682, 0.0
        %v716 = vmax.f32 %v684, %v692
        %v717 = vmax.f32 %v685, %v693
        %v718 = vmax.f32 %v686, %v694
        %v719 = vmax.f32 %v687, %v695
        %v720 = vmax.f32 %v688, %v696
        %v721 = vmax.f32 %v689, %v697
        %v722 = vmax.f32 %v690, %v698
        %v723 = vmax.f32 %v691, %v699
        %v724 = vmax.f32 %v700, %v708
        %v725 = vmax.f32 %v701, %v709
        %v726 = vmax.f32 %v702, %v710
        %v727 = vmax.f32 %v703, %v711
        %v728 = vmax.f32 %v704, %v712
        %v729 = vmax.f32 %v705, %v713
        %v730 = vmax.f32 %v706, %v714
        %v731 = vmax.f32 %v707, %v715
        %v732 = vmax.f32 %v716, %v717
        %v733 = vmax.f32 %v718, %v719
        %v734 = vmax.f32 %v720, %v721
        %v735 = vmax.f32 %v722, %v723
        %v736 = vmax.f32 %v724, %v725
        %v737 = vmax.f32 %v726, %v727
        %v738 = vmax.f32 %v728, %v729
        %v739 = vmax.f32 %v730, %v731
        %vm744 = vcmask 1040384
        %v745 = vrot.slane %v736, 7
        %v746 = vrot.slane %v737, 7
        %v747 = vsel %vm744, %v745, %v746
        %v748 = vrot.slane %v738, 7
        %v749 = vsel %vm744, %v746, %v748
        %v750 = vrot.slane %v739, 7
        %v751 = vsel %vm744, %v748, %v750
        %v756 = vsel %vm744, 0.0, %v745
        %vm761 = vcmask 1046528
        %v762 = vrot.slane %v732, 1
        %v763 = vrot.slane %v733, 1
        %v764 = vsel %vm761, %v762, %v763
        %v765 = vrot.slane %v734, 1
        %v766 = vsel %vm761, %v763, %v765
        %v767 = vrot.slane %v735, 1
        %v768 = vsel %vm761, %v765, %v767
        %v773 = vsel %vm761, %v767, 0.0
        %v774 = vlaneseq
        %v775 = vshrl.u32 %v774, 7
        %v776 = vadd.s32 %v775, 8
        %v777 = vadd.s32 %v775, 16
        %v778 = vadd.s32 %v775, 24
        %vm779 = vcmp.lt.s32.totalorder %v775, 0
        %v780 = vsub.s32 0, %v775
        %v781 = vsel %vm779, %v780, %v775
        %v782 = vshrl.u32 %v781, 2
        %v783 = vand.u32 %v781, 3
        %v784 = vsub.s32 0, %v783
        %v785 = vsel %vm779, %v784, %v783
        %vm786 = vcmp.lt.s32.totalorder %v776, 0
        %v787 = vsub.s32 0, %v776
        %v788 = vsel %vm786, %v787, %v776
        %v789 = vshrl.u32 %v788, 2
        %v790 = vand.u32 %v788, 3
        %v791 = vsub.s32 0, %v790
        %v792 = vsel %vm786, %v791, %v790
        %vm793 = vcmp.lt.s32.totalorder %v777, 0
        %v794 = vsub.s32 0, %v777
        %v795 = vsel %vm793, %v794, %v777
        %v796 = vshrl.u32 %v795, 2
        %v797 = vand.u32 %v795, 3
        %v798 = vsub.s32 0, %v797
        %v799 = vsel %vm793, %v798, %v797
        %vm800 = vcmp.lt.s32.totalorder %v778, 0
        %v801 = vsub.s32 0, %v778
        %v802 = vsel %vm800, %v801, %v778
        %v803 = vshrl.u32 %v802, 2
        %v804 = vand.u32 %v802, 3
        %v805 = vsub.s32 0, %v804
        %v806 = vsel %vm800, %v805, %v804
        %vm807 = vcmp.ne.s32.totalorder %v785, 0
        %vm808 = vcmp.ne.s32.totalorder %v792, 0
        %vm809 = vcmp.ne.s32.totalorder %v799, 0
        %vm810 = vcmp.ne.s32.totalorder %v806, 0
        %vm811 = vcmp.lt.s32.totalorder %v785, 0
        %vm812 = vcmp.lt.s32.totalorder %v792, 0
        %vm813 = vcmp.lt.s32.totalorder %v799, 0
        %vm814 = vcmp.lt.s32.totalorder %v806, 0
        %vm815 = vmand %vm811, %vm807
        %vm816 = vmand %vm812, %vm808
        %vm817 = vmand %vm813, %vm809
        %vm818 = vmand %vm814, %vm810
        %v819 = vadd.s32 %v785, 4
        %v820 = vadd.s32 %v792, 4
        %v821 = vadd.s32 %v799, 4
        %v822 = vadd.s32 %v806, 4
        %v823 = vsel %vm815, %v819, %v785
        %v824 = vsel %vm816, %v820, %v792
        %v825 = vsel %vm817, %v821, %v799
        %v826 = vsel %vm818, %v822, %v806
        %vm827 = vcmp.eq.s32.totalorder %v823, 0
        %vm828 = vcmp.eq.s32.totalorder %v824, 0
        %vm829 = vcmp.eq.s32.totalorder %v825, 0
        %vm830 = vcmp.eq.s32.totalorder %v826, 0
        %v831 = vsel %vm827, 0.0, %v756
        %v832 = vsel %vm828, 0.0, %v747
        %v833 = vsel %vm829, 0.0, %v749
        %v834 = vsel %vm830, 0.0, %v751
        %vm835 = vcmp.eq.s32.totalorder %v823, 3
        %vm836 = vcmp.eq.s32.totalorder %v824, 3
        %vm837 = vcmp.eq.s32.totalorder %v825, 3
        %vm838 = vcmp.eq.s32.totalorder %v826, 3
        %v839 = vsel %vm835, 0.0, %v764
        %v840 = vsel %vm836, 0.0, %v766
        %v841 = vsel %vm837, 0.0, %v768
        %v842 = vsel %vm838, 0.0, %v773
        %v843 = vld [vmem:[%s3] sm:$0xff]
        %v844 = vld [vmem:[%s3 + $0x8] sm:$0xff]
        %v845 = vld [vmem:[%s3 + $0x10] sm:$0xff]
        %v846 = vld [vmem:[%s3 + $0x18] sm:$0xff]
        %v847 = vld [vmem:[%s3 + $0x20] sm:$0xff]
        %v848 = vld [vmem:[%s3 + $0x28] sm:$0xff]
        %v849 = vld [vmem:[%s3 + $0x30] sm:$0xff]
        %v850 = vld [vmem:[%s3 + $0x38] sm:$0xff]
        %v851 = vld [vmem:[%s3 + $0x40] sm:$0xff]
        %v852 = vld [vmem:[%s3 + $0x48] sm:$0xff]
        %v853 = vld [vmem:[%s3 + $0x50] sm:$0xff]
        %v854 = vld [vmem:[%s3 + $0x58] sm:$0xff]
        %v855 = vld [vmem:[%s3 + $0x60] sm:$0xff]
        %v856 = vld [vmem:[%s3 + $0x68] sm:$0xff]
        %v857 = vld [vmem:[%s3 + $0x70] sm:$0xff]
        %v858 = vld [vmem:[%s3 + $0x78] sm:$0xff]
        %v859 = vld [vmem:[%s3 + $0x80] sm:$0xff]
        %v860 = vld [vmem:[%s3 + $0x88] sm:$0xff]
        %v861 = vld [vmem:[%s3 + $0x90] sm:$0xff]
        %v862 = vld [vmem:[%s3 + $0x98] sm:$0xff]
        %v863 = vld [vmem:[%s3 + $0xa0] sm:$0xff]
        %v864 = vld [vmem:[%s3 + $0xa8] sm:$0xff]
        %v865 = vld [vmem:[%s3 + $0xb0] sm:$0xff]
        %v866 = vld [vmem:[%s3 + $0xb8] sm:$0xff]
        %v867 = vld [vmem:[%s3 + $0xc0] sm:$0xff]
        %v868 = vld [vmem:[%s3 + $0xc8] sm:$0xff]
        %v869 = vld [vmem:[%s3 + $0xd0] sm:$0xff]
        %v870 = vld [vmem:[%s3 + $0xd8] sm:$0xff]
        %v871 = vld [vmem:[%s3 + $0xe0] sm:$0xff]
        %v872 = vld [vmem:[%s3 + $0xe8] sm:$0xff]
        %v873 = vld [vmem:[%s3 + $0xf0] sm:$0xff]
        %v874 = vld [vmem:[%s3 + $0xf8] sm:$0xff]
        %v875 = vld [vmem:[%s3 + $0x100] sm:$0xff]
        %v876 = vld [vmem:[%s3 + $0x108] sm:$0xff]
        %v877 = vld [vmem:[%s3 + $0x110] sm:$0xff]
        %v878 = vld [vmem:[%s3 + $0x118] sm:$0xff]
        %v879 = vld [vmem:[%s3 + $0x120] sm:$0xff]
        %v880 = vld [vmem:[%s3 + $0x128] sm:$0xff]
        %v881 = vld [vmem:[%s3 + $0x130] sm:$0xff]
        %v882 = vld [vmem:[%s3 + $0x138] sm:$0xff]
        %v883 = vld [vmem:[%s3 + $0x140] sm:$0xff]
        %v884 = vld [vmem:[%s3 + $0x148] sm:$0xff]
        %v885 = vld [vmem:[%s3 + $0x150] sm:$0xff]
        %v886 = vld [vmem:[%s3 + $0x158] sm:$0xff]
        %v887 = vld [vmem:[%s3 + $0x160] sm:$0xff]
        %v888 = vld [vmem:[%s3 + $0x168] sm:$0xff]
        %v889 = vld [vmem:[%s3 + $0x170] sm:$0xff]
        %v890 = vld [vmem:[%s3 + $0x178] sm:$0xff]
        %v891 = vld [vmem:[%s4] sm:$0x1]
        %v893 = vlaneseq
        %v894 = vshrl.u32 %v893, 7
        %v895 = vsub.s32 0, %v894
        %v896 = vrot.slane %v891, %v895
        %898 = vmatprep.subr.mxu0 0.0
        %899 = vmatpush1.msra.mxu0 %v858
        %900 = vmatprep.subr.mxu0 0.0
        %901 = vmatpush1.msra.mxu0 %v857
        %902 = vmatprep.subr.mxu0 0.0
        %903 = vmatpush1.msra.mxu0 %v856
        %904 = vmatprep.subr.mxu0 0.0
        %905 = vmatpush1.msra.mxu0 %v855
        %906 = vmatprep.subr.mxu0 0.0
        %907 = vmatpush1.msra.mxu0 %v854
        %908 = vmatprep.subr.mxu0 0.0
        %909 = vmatpush1.msra.mxu0 %v853
        %910 = vmatprep.subr.mxu0 0.0
        %911 = vmatpush1.msra.mxu0 %v852
        %912 = vmatprep.subr.mxu0 0.0
        %913 = vmatpush1.msra.mxu0 %v851
        %914 = vmatprep.subr.mxu0 0.0
        %915 = vmatpush1.msra.mxu0 %v850
        %916 = vmatprep.subr.mxu0 0.0
        %917 = vmatpush1.msra.mxu0 %v849
        %918 = vmatprep.subr.mxu0 0.0
        %919 = vmatpush1.msra.mxu0 %v848
        %920 = vmatprep.subr.mxu0 0.0
        %921 = vmatpush1.msra.mxu0 %v847
        %922 = vmatprep.subr.mxu0 0.0
        %923 = vmatpush1.msra.mxu0 %v846
        %924 = vmatprep.subr.mxu0 0.0
        %925 = vmatpush1.msra.mxu0 %v845
        %926 = vmatprep.subr.mxu0 0.0
        %927 = vmatpush1.msra.mxu0 %v844
        %928 = vmatprep.subr.mxu0 0.0
        %929 = vmatpush1.msra.mxu0 %v843
        %930 = vmatprep.subr.mxu0 0.0
        %931 = vmatpush2.msra.mxu0 %v874
        %932 = vmatprep.subr.mxu0 0.0
        %933 = vmatpush2.msra.mxu0 %v873
        %934 = vmatprep.subr.mxu0 0.0
        %935 = vmatpush2.msra.mxu0 %v872
        %936 = vmatprep.subr.mxu0 0.0
        %937 = vmatpush2.msra.mxu0 %v871
        %938 = vmatprep.subr.mxu0 0.0
        %939 = vmatpush2.msra.mxu0 %v870
        %940 = vmatprep.subr.mxu0 0.0
        %941 = vmatpush2.msra.mxu0 %v869
        %942 = vmatprep.subr.mxu0 0.0
        %943 = vmatpush2.msra.mxu0 %v868
        %944 = vmatprep.subr.mxu0 0.0
        %945 = vmatpush2.msra.mxu0 %v867
        %946 = vmatprep.subr.mxu0 0.0
        %947 = vmatpush2.msra.mxu0 %v866
        %948 = vmatprep.subr.mxu0 0.0
        %949 = vmatpush2.msra.mxu0 %v865
        %950 = vmatprep.subr.mxu0 0.0
        %951 = vmatpush2.msra.mxu0 %v864
        %952 = vmatprep.subr.mxu0 0.0
        %953 = vmatpush2.msra.mxu0 %v863
        %954 = vmatprep.subr.mxu0 0.0
        %955 = vmatpush2.msra.mxu0 %v862
        %956 = vmatprep.subr.mxu0 0.0
        %957 = vmatpush2.msra.mxu0 %v861
        %958 = vmatprep.subr.mxu0 0.0
        %959 = vmatpush2.msra.mxu0 %v860
        %960 = vmatprep.subr.mxu0 0.0
        %961 = vmatpush2.msra.mxu0 %v859
        %962 = vmatprep.mubr.f32.mxu0 %v732
        %963 = vmatmul.mubr.f32.gmra.mxu0 %v831
        %v964 = vpop.f32.mrf.mxu0
        %v965 = vadd.f32 %v896, %v964
        %v966 = vpop.f32.mrf.mxu0
        %967 = vmatprep.mubr.f32.mxu0 %v733
        %968 = vmatmul.mubr.f32.gmra.mxu0 %v832
        %v969 = vpop.f32.mrf.mxu0
        %v970 = vadd.f32 %v896, %v969
        %v971 = vpop.f32.mrf.mxu0
        %972 = vmatprep.mubr.f32.mxu0 %v734
        %973 = vmatmul.mubr.f32.gmra.mxu0 %v833
        %v974 = vpop.f32.mrf.mxu0
        %v975 = vadd.f32 %v896, %v974
        %v976 = vpop.f32.mrf.mxu0
        %977 = vmatprep.mubr.f32.mxu0 %v735
        %978 = vmatmul.mubr.f32.gmra.mxu0 %v834
        %v979 = vpop.f32.mrf.mxu0
        %v980 = vadd.f32 %v896, %v979
        %v981 = vpop.f32.mrf.mxu0
        %982 = vmatprep.mubr.f32.mxu0 %v736
        %983 = vmatmul.mubr.f32.gmra.mxu0 %v732
        %v984 = vpop.f32.mrf.mxu0
        %v985 = vadd.f32 %v896, %v984
        %v986 = vpop.f32.mrf.mxu0
        %987 = vmatprep.mubr.f32.mxu0 %v737
        %988 = vmatmul.mubr.f32.gmra.mxu0 %v733
        %v989 = vpop.f32.mrf.mxu0
        %v990 = vadd.f32 %v896, %v989
        %v991 = vpop.f32.mrf.mxu0
        %992 = vmatprep.mubr.f32.mxu0 %v738
        %993 = vmatmul.mubr.f32.gmra.mxu0 %v734
        %v994 = vpop.f32.mrf.mxu0
        %v995 = vadd.f32 %v896, %v994
        %v996 = vpop.f32.mrf.mxu0
        %997 = vmatprep.mubr.f32.mxu0 %v739
        %998 = vmatmul.mubr.f32.gmra.mxu0 %v735
        %v999 = vpop.f32.mrf.mxu0
        %v1000 = vadd.f32 %v896, %v999
        %v1001 = vpop.f32.mrf.mxu0
        %1002 = vdwg.mxu0
        %1003 = vmatprep.subr.mxu0 0.0
        %1004 = vmatpush1.msra.mxu0 %v890
        %1005 = vmatprep.subr.mxu0 0.0
        %1006 = vmatpush1.msra.mxu0 %v889
        %1007 = vmatprep.subr.mxu0 0.0
        %1008 = vmatpush1.msra.mxu0 %v888
        %1009 = vmatprep.subr.mxu0 0.0
        %1010 = vmatpush1.msra.mxu0 %v887
        %1011 = vmatprep.subr.mxu0 0.0
        %1012 = vmatpush1.msra.mxu0 %v886
        %1013 = vmatprep.subr.mxu0 0.0
        %1014 = vmatpush1.msra.mxu0 %v885
        %1015 = vmatprep.subr.mxu0 0.0
        %1016 = vmatpush1.msra.mxu0 %v884
        %1017 = vmatprep.subr.mxu0 0.0
        %1018 = vmatpush1.msra.mxu0 %v883
        %1019 = vmatprep.subr.mxu0 0.0
        %1020 = vmatpush1.msra.mxu0 %v882
        %1021 = vmatprep.subr.mxu0 0.0
        %1022 = vmatpush1.msra.mxu0 %v881
        %1023 = vmatprep.subr.mxu0 0.0
        %1024 = vmatpush1.msra.mxu0 %v880
        %1025 = vmatprep.subr.mxu0 0.0
        %1026 = vmatpush1.msra.mxu0 %v879
        %1027 = vmatprep.subr.mxu0 0.0
        %1028 = vmatpush1.msra.mxu0 %v878
        %1029 = vmatprep.subr.mxu0 0.0
        %1030 = vmatpush1.msra.mxu0 %v877
        %1031 = vmatprep.subr.mxu0 0.0
        %1032 = vmatpush1.msra.mxu0 %v876
        %1033 = vmatprep.subr.mxu0 0.0
        %1034 = vmatpush1.msra.mxu0 %v875
        %1035 = vmatprep.subr.mxu0 0.0
        %1036 = vmatpush2.msra.mxu0 0.0
        %1037 = vmatprep.subr.mxu0 0.0
        %1038 = vmatpush2.msra.mxu0 0.0
        %1039 = vmatprep.subr.mxu0 0.0
        %1040 = vmatpush2.msra.mxu0 0.0
        %1041 = vmatprep.subr.mxu0 0.0
        %1042 = vmatpush2.msra.mxu0 0.0
        %1043 = vmatprep.subr.mxu0 0.0
        %1044 = vmatpush2.msra.mxu0 0.0
        %1045 = vmatprep.subr.mxu0 0.0
        %1046 = vmatpush2.msra.mxu0 0.0
        %1047 = vmatprep.subr.mxu0 0.0
        %1048 = vmatpush2.msra.mxu0 0.0
        %1049 = vmatprep.subr.mxu0 0.0
        %1050 = vmatpush2.msra.mxu0 0.0
        %1051 = vmatprep.subr.mxu0 0.0
        %1052 = vmatpush2.msra.mxu0 0.0
        %1053 = vmatprep.subr.mxu0 0.0
        %1054 = vmatpush2.msra.mxu0 0.0
        %1055 = vmatprep.subr.mxu0 0.0
        %1056 = vmatpush2.msra.mxu0 0.0
        %1057 = vmatprep.subr.mxu0 0.0
        %1058 = vmatpush2.msra.mxu0 0.0
        %1059 = vmatprep.subr.mxu0 0.0
        %1060 = vmatpush2.msra.mxu0 0.0
        %1061 = vmatprep.subr.mxu0 0.0
        %1062 = vmatpush2.msra.mxu0 0.0
        %1063 = vmatprep.subr.mxu0 0.0
        %1064 = vmatpush2.msra.mxu0 0.0
        %1065 = vmatprep.subr.mxu0 0.0
        %1066 = vmatpush2.msra.mxu0 0.0
        %1067 = vmatprep.mubr.f32.mxu0 0.0
        %1068 = vmatmul.mubr.f32.gmra.mxu0 %v736
        %v1069 = vpop.f32.mrf.mxu0
        %v1070 = vadd.f32 %v965, %v1069
        %v1071 = vpop.f32.mrf.mxu0
        %1072 = vmatprep.mubr.f32.mxu0 0.0
        %1073 = vmatmul.mubr.f32.gmra.mxu0 %v737
        %v1074 = vpop.f32.mrf.mxu0
        %v1075 = vadd.f32 %v970, %v1074
        %v1076 = vpop.f32.mrf.mxu0
        %1077 = vmatprep.mubr.f32.mxu0 0.0
        %1078 = vmatmul.mubr.f32.gmra.mxu0 %v738
        %v1079 = vpop.f32.mrf.mxu0
        %v1080 = vadd.f32 %v975, %v1079
        %v1081 = vpop.f32.mrf.mxu0
        %1082 = vmatprep.mubr.f32.mxu0 0.0
        %1083 = vmatmul.mubr.f32.gmra.mxu0 %v739
        %v1084 = vpop.f32.mrf.mxu0
        %v1085 = vadd.f32 %v980, %v1084
        %v1086 = vpop.f32.mrf.mxu0
        %1087 = vmatprep.mubr.f32.mxu0 0.0
        %1088 = vmatmul.mubr.f32.gmra.mxu0 %v839
        %v1089 = vpop.f32.mrf.mxu0
        %v1090 = vadd.f32 %v985, %v1089
        %v1091 = vpop.f32.mrf.mxu0
        %1092 = vmatprep.mubr.f32.mxu0 0.0
        %1093 = vmatmul.mubr.f32.gmra.mxu0 %v840
        %v1094 = vpop.f32.mrf.mxu0
        %v1095 = vadd.f32 %v990, %v1094
        %v1096 = vpop.f32.mrf.mxu0
        %1097 = vmatprep.mubr.f32.mxu0 0.0
        %1098 = vmatmul.mubr.f32.gmra.mxu0 %v841
        %v1099 = vpop.f32.mrf.mxu0
        %v1100 = vadd.f32 %v995, %v1099
        %v1101 = vpop.f32.mrf.mxu0
        %1102 = vmatprep.mubr.f32.mxu0 0.0
        %1103 = vmatmul.mubr.f32.gmra.mxu0 %v842
        %v1104 = vpop.f32.mrf.mxu0
        %v1105 = vadd.f32 %v1000, %v1104
        %v1106 = vpop.f32.mrf.mxu0
        %1107 = vdwg.mxu0
        %v1108 = vmax.f32 %v1070, 0.0
        %v1109 = vmax.f32 %v1075, 0.0
        %v1110 = vmax.f32 %v1080, 0.0
        %v1111 = vmax.f32 %v1085, 0.0
        %v1112 = vmax.f32 %v1090, 0.0
        %v1113 = vmax.f32 %v1095, 0.0
        %v1114 = vmax.f32 %v1100, 0.0
        %v1115 = vmax.f32 %v1105, 0.0
        %v1116 = vmax.f32 %v1108, %v1112
        %v1117 = vmax.f32 %v1109, %v1113
        %v1118 = vmax.f32 %v1110, %v1114
        %v1119 = vmax.f32 %v1111, %v1115
        %1124 = vrot.lane.b32.xlu0 %v1116, 112
        %v1125 = vpop.permute.xlu0 %1124
        %1126 = vrot.lane.b32.xlu0 %v1117, 112
        %v1127 = vpop.permute.xlu0 %1126
        %1128 = vrot.lane.b32.xlu0 %v1118, 112
        %v1129 = vpop.permute.xlu0 %1128
        %1130 = vrot.lane.b32.xlu0 %v1119, 112
        %v1131 = vpop.permute.xlu0 %1130
        %v1136 = vmax.f32 %v1116, %v1125
        %v1137 = vmax.f32 %v1117, %v1127
        %v1138 = vmax.f32 %v1118, %v1129
        %v1139 = vmax.f32 %v1119, %v1131
        %v1140 = vld [vmem:[%s5] sm:$0xff]
        %v1141 = vld [vmem:[%s5 + $0x8] sm:$0xff]
        %v1142 = vld [vmem:[%s5 + $0x10] sm:$0xff]
        %v1143 = vld [vmem:[%s5 + $0x18] sm:$0xff]
        %v1144 = vld [vmem:[%s6] sm:$0x3]
        %v1146 = vlaneseq
        %v1147 = vshrl.u32 %v1146, 7
        %v1148 = vsub.s32 0, %v1147
        %v1149 = vrot.slane %v1144, %v1148
        %v1150 = vlaneseq
        %v1151 = vshrl.u32 %v1150, 7
        %v1152 = vsub.s32 1, %v1151
        %v1153 = vrot.slane %v1144, %v1152
        %vm1156 = vcmask 130048
        %v1158 = vsel %vm1156, %v1136, 0
        %v1161 = vsel %vm1156, %v1137, 0
        %v1164 = vsel %vm1156, %v1138, 0
        %v1167 = vsel %vm1156, %v1139, 0
        %1169 = vmatprep.subr.mxu0 0.0
        %1170 = vmatpush1.msra.mxu0 0.0
        %1171 = vmatprep.subr.mxu0 0.0
        %1172 = vmatpush1.msra.mxu0 0.0
        %1173 = vmatprep.subr.mxu0 0.0
        %1174 = vmatpush1.msra.mxu0 0.0
        %1175 = vmatprep.subr.mxu0 0.0
        %1176 = vmatpush1.msra.mxu0 0.0
        %1177 = vmatprep.subr.mxu0 0.0
        %1178 = vmatpush1.msra.mxu0 0.0
        %1179 = vmatprep.subr.mxu0 0.0
        %1180 = vmatpush1.msra.mxu0 0.0
        %1181 = vmatprep.subr.mxu0 0.0
        %1182 = vmatpush1.msra.mxu0 0.0
        %1183 = vmatprep.subr.mxu0 0.0
        %1184 = vmatpush1.msra.mxu0 0.0
        %1185 = vmatprep.subr.mxu0 0.0
        %1186 = vmatpush1.msra.mxu0 0.0
        %1187 = vmatprep.subr.mxu0 0.0
        %1188 = vmatpush1.msra.mxu0 0.0
        %1189 = vmatprep.subr.mxu0 0.0
        %1190 = vmatpush1.msra.mxu0 0.0
        %1191 = vmatprep.subr.mxu0 0.0
        %1192 = vmatpush1.msra.mxu0 0.0
        %1193 = vmatprep.subr.mxu0 0.0
        %1194 = vmatpush1.msra.mxu0 0.0
        %1195 = vmatprep.subr.mxu0 0.0
        %1196 = vmatpush1.msra.mxu0 0.0
        %1197 = vmatprep.subr.mxu0 %v1143
        %1198 = vmatpush1.msra.mxu0 %v1142
        %1199 = vmatprep.subr.mxu0 %v1141
        %1200 = vmatpush1.msra.mxu0 %v1140
        %1201 = vmatprep.subr.mxu0 0.0
        %1202 = vmatpush2.msra.mxu0 0.0
        %1203 = vmatprep.subr.mxu0 0.0
        %1204 = vmatpush2.msra.mxu0 0.0
        %1205 = vmatprep.subr.mxu0 0.0
        %1206 = vmatpush2.msra.mxu0 0.0
        %1207 = vmatprep.subr.mxu0 0.0
        %1208 = vmatpush2.msra.mxu0 0.0
        %1209 = vmatprep.subr.mxu0 0.0
        %1210 = vmatpush2.msra.mxu0 0.0
        %1211 = vmatprep.subr.mxu0 0.0
        %1212 = vmatpush2.msra.mxu0 0.0
        %1213 = vmatprep.subr.mxu0 0.0
        %1214 = vmatpush2.msra.mxu0 0.0
        %1215 = vmatprep.subr.mxu0 0.0
        %1216 = vmatpush2.msra.mxu0 0.0
        %1217 = vmatprep.subr.mxu0 0.0
        %1218 = vmatpush2.msra.mxu0 0.0
        %1219 = vmatprep.subr.mxu0 0.0
        %1220 = vmatpush2.msra.mxu0 0.0
        %1221 = vmatprep.subr.mxu0 0.0
        %1222 = vmatpush2.msra.mxu0 0.0
        %1223 = vmatprep.subr.mxu0 0.0
        %1224 = vmatpush2.msra.mxu0 0.0
        %1225 = vmatprep.subr.mxu0 0.0
        %1226 = vmatpush2.msra.mxu0 0.0
        %1227 = vmatprep.subr.mxu0 0.0
        %1228 = vmatpush2.msra.mxu0 0.0
        %1229 = vmatprep.subr.mxu0 0.0
        %1230 = vmatpush2.msra.mxu0 0.0
        %1231 = vmatprep.subr.mxu0 0.0
        %1232 = vmatpush2.msra.mxu0 0.0
        %1233 = vmatprep.mubr.f32.mxu0 0.0
        %1234 = vmatmul.mubr.f32.gmra.mxu0 %v1158
        %v1235 = vpop.f32.mrf.mxu0
        %v1236 = vadd.f32 %v1149, %v1235
        %v1237 = vpop.f32.mrf.mxu0
        %v1238 = vadd.f32 %v1153, %v1237
        %1239 = vmatprep.mubr.f32.mxu0 0.0
        %1240 = vmatmul.mubr.f32.gmra.mxu0 %v1161
        %v1241 = vpop.f32.mrf.mxu0
        %v1242 = vadd.f32 %v1149, %v1241
        %v1243 = vpop.f32.mrf.mxu0
        %v1244 = vadd.f32 %v1153, %v1243
        %1245 = vmatprep.mubr.f32.mxu0 0.0
        %1246 = vmatmul.mubr.f32.gmra.mxu0 %v1164
        %v1247 = vpop.f32.mrf.mxu0
        %v1248 = vadd.f32 %v1149, %v1247
        %v1249 = vpop.f32.mrf.mxu0
        %v1250 = vadd.f32 %v1153, %v1249
        %1251 = vmatprep.mubr.f32.mxu0 0.0
        %1252 = vmatmul.mubr.f32.gmra.mxu0 %v1167
        %v1253 = vpop.f32.mrf.mxu0
        %v1254 = vadd.f32 %v1149, %v1253
        %v1255 = vpop.f32.mrf.mxu0
        %v1256 = vadd.f32 %v1153, %v1255
        %1257 = vdwg.mxu0
        %v1258 = vmax.f32 %v1236, 0.0
        %v1259 = vmax.f32 %v1238, 0.0
        %v1260 = vmax.f32 %v1242, 0.0
        %v1261 = vmax.f32 %v1244, 0.0
        %v1262 = vmax.f32 %v1248, 0.0
        %v1263 = vmax.f32 %v1250, 0.0
        %v1264 = vmax.f32 %v1254, 0.0
        %v1265 = vmax.f32 %v1256, 0.0
        %v1266 = vld [vmem:[%s7] sm:$0xff]
        %v1267 = vld [vmem:[%s7 + $0x8] sm:$0xff]
        %v1268 = vld [vmem:[%s7 + $0x10] sm:$0xff]
        %v1269 = vld [vmem:[%s7 + $0x18] sm:$0xff]
        %v1270 = vld [vmem:[%s7 + $0x20] sm:$0xff]
        %v1271 = vld [vmem:[%s7 + $0x28] sm:$0xff]
        %v1272 = vld [vmem:[%s7 + $0x30] sm:$0xff]
        %v1273 = vld [vmem:[%s7 + $0x38] sm:$0xff]
        %v1274 = vld [vmem:[%s7 + $0x40] sm:$0xff]
        %v1275 = vld [vmem:[%s7 + $0x48] sm:$0xff]
        %v1276 = vld [vmem:[%s7 + $0x50] sm:$0xff]
        %v1277 = vld [vmem:[%s7 + $0x58] sm:$0xff]
        %v1278 = vld [vmem:[%s7 + $0x60] sm:$0xff]
        %v1279 = vld [vmem:[%s7 + $0x68] sm:$0xff]
        %v1280 = vld [vmem:[%s7 + $0x70] sm:$0xff]
        %v1281 = vld [vmem:[%s7 + $0x78] sm:$0xff]
        %v1282 = vld [vmem:[%s7 + $0x80] sm:$0xff]
        %v1283 = vld [vmem:[%s7 + $0x88] sm:$0xff]
        %v1284 = vld [vmem:[%s7 + $0x90] sm:$0xff]
        %v1285 = vld [vmem:[%s7 + $0x98] sm:$0xff]
        %v1286 = vld [vmem:[%s7 + $0xa0] sm:$0xff]
        %v1287 = vld [vmem:[%s7 + $0xa8] sm:$0xff]
        %v1288 = vld [vmem:[%s7 + $0xb0] sm:$0xff]
        %v1289 = vld [vmem:[%s7 + $0xb8] sm:$0xff]
        %v1290 = vld [vmem:[%s7 + $0xc0] sm:$0xff]
        %v1291 = vld [vmem:[%s7 + $0xc8] sm:$0xff]
        %v1292 = vld [vmem:[%s7 + $0xd0] sm:$0xff]
        %v1293 = vld [vmem:[%s7 + $0xd8] sm:$0xff]
        %v1294 = vld [vmem:[%s7 + $0xe0] sm:$0xff]
        %v1295 = vld [vmem:[%s7 + $0xe8] sm:$0xff]
        %v1296 = vld [vmem:[%s7 + $0xf0] sm:$0xff]
        %v1297 = vld [vmem:[%s7 + $0xf8] sm:$0xff]
        %v1298 = vld [vmem:[%s8] sm:$0x1]
        %v1300 = vlaneseq
        %v1301 = vshrl.u32 %v1300, 7
        %v1302 = vsub.s32 0, %v1301
        %v1303 = vrot.slane %v1298, %v1302
        %1305 = vmatprep.subr.mxu0 0.0
        %1306 = vmatpush1.msra.mxu0 %v1281
        %1307 = vmatprep.subr.mxu0 0.0
        %1308 = vmatpush1.msra.mxu0 %v1280
        %1309 = vmatprep.subr.mxu0 0.0
        %1310 = vmatpush1.msra.mxu0 %v1279
        %1311 = vmatprep.subr.mxu0 0.0
        %1312 = vmatpush1.msra.mxu0 %v1278
        %1313 = vmatprep.subr.mxu0 0.0
        %1314 = vmatpush1.msra.mxu0 %v1277
        %1315 = vmatprep.subr.mxu0 0.0
        %1316 = vmatpush1.msra.mxu0 %v1276
        %1317 = vmatprep.subr.mxu0 0.0
        %1318 = vmatpush1.msra.mxu0 %v1275
        %1319 = vmatprep.subr.mxu0 0.0
        %1320 = vmatpush1.msra.mxu0 %v1274
        %1321 = vmatprep.subr.mxu0 0.0
        %1322 = vmatpush1.msra.mxu0 %v1273
        %1323 = vmatprep.subr.mxu0 0.0
        %1324 = vmatpush1.msra.mxu0 %v1272
        %1325 = vmatprep.subr.mxu0 0.0
        %1326 = vmatpush1.msra.mxu0 %v1271
        %1327 = vmatprep.subr.mxu0 0.0
        %1328 = vmatpush1.msra.mxu0 %v1270
        %1329 = vmatprep.subr.mxu0 0.0
        %1330 = vmatpush1.msra.mxu0 %v1269
        %1331 = vmatprep.subr.mxu0 0.0
        %1332 = vmatpush1.msra.mxu0 %v1268
        %1333 = vmatprep.subr.mxu0 0.0
        %1334 = vmatpush1.msra.mxu0 %v1267
        %1335 = vmatprep.subr.mxu0 0.0
        %1336 = vmatpush1.msra.mxu0 %v1266
        %1337 = vmatprep.subr.mxu0 0.0
        %1338 = vmatpush2.msra.mxu0 %v1297
        %1339 = vmatprep.subr.mxu0 0.0
        %1340 = vmatpush2.msra.mxu0 %v1296
        %1341 = vmatprep.subr.mxu0 0.0
        %1342 = vmatpush2.msra.mxu0 %v1295
        %1343 = vmatprep.subr.mxu0 0.0
        %1344 = vmatpush2.msra.mxu0 %v1294
        %1345 = vmatprep.subr.mxu0 0.0
        %1346 = vmatpush2.msra.mxu0 %v1293
        %1347 = vmatprep.subr.mxu0 0.0
        %1348 = vmatpush2.msra.mxu0 %v1292
        %1349 = vmatprep.subr.mxu0 0.0
        %1350 = vmatpush2.msra.mxu0 %v1291
        %1351 = vmatprep.subr.mxu0 0.0
        %1352 = vmatpush2.msra.mxu0 %v1290
        %1353 = vmatprep.subr.mxu0 0.0
        %1354 = vmatpush2.msra.mxu0 %v1289
        %1355 = vmatprep.subr.mxu0 0.0
        %1356 = vmatpush2.msra.mxu0 %v1288
        %1357 = vmatprep.subr.mxu0 0.0
        %1358 = vmatpush2.msra.mxu0 %v1287
        %1359 = vmatprep.subr.mxu0 0.0
        %1360 = vmatpush2.msra.mxu0 %v1286
        %1361 = vmatprep.subr.mxu0 0.0
        %1362 = vmatpush2.msra.mxu0 %v1285
        %1363 = vmatprep.subr.mxu0 0.0
        %1364 = vmatpush2.msra.mxu0 %v1284
        %1365 = vmatprep.subr.mxu0 0.0
        %1366 = vmatpush2.msra.mxu0 %v1283
        %1367 = vmatprep.subr.mxu0 0.0
        %1368 = vmatpush2.msra.mxu0 %v1282
        %1369 = vmatprep.mubr.f32.mxu0 %v1259
        %1370 = vmatmul.mubr.f32.gmra.mxu0 %v1258
        %v1371 = vpop.f32.mrf.mxu0
        %v1372 = vadd.f32 %v1303, %v1371
        %v1373 = vpop.f32.mrf.mxu0
        %1374 = vmatprep.mubr.f32.mxu0 %v1261
        %1375 = vmatmul.mubr.f32.gmra.mxu0 %v1260
        %v1376 = vpop.f32.mrf.mxu0
        %v1377 = vadd.f32 %v1303, %v1376
        %v1378 = vpop.f32.mrf.mxu0
        %1379 = vmatprep.mubr.f32.mxu0 %v1263
        %1380 = vmatmul.mubr.f32.gmra.mxu0 %v1262
        %v1381 = vpop.f32.mrf.mxu0
        %v1382 = vadd.f32 %v1303, %v1381
        %v1383 = vpop.f32.mrf.mxu0
        %1384 = vmatprep.mubr.f32.mxu0 %v1265
        %1385 = vmatmul.mubr.f32.gmra.mxu0 %v1264
        %v1386 = vpop.f32.mrf.mxu0
        %v1387 = vadd.f32 %v1303, %v1386
        %v1388 = vpop.f32.mrf.mxu0
        %1389 = vdwg.mxu0
        %v1390 = vsub.f32 0.0, %v1372
        %v1391 = vsub.f32 0.0, %v1377
        %v1392 = vsub.f32 0.0, %v1382
        %v1393 = vsub.f32 0.0, %v1387
        %v1394 = vmul.f32 %v1390, 1.442695
        %v1395 = vpow.pop %v1394
        %v1396 = vmul.f32 %v1391, 1.442695
        %v1397 = vpow.pop %v1396
        %v1398 = vmul.f32 %v1392, 1.442695
        %v1399 = vpow.pop %v1398
        %v1400 = vmul.f32 %v1393, 1.442695
        %v1401 = vpow.pop %v1400
        %v1402 = vadd.f32 %v1395, 1.0
        %v1403 = vadd.f32 %v1397, 1.0
        %v1404 = vadd.f32 %v1399, 1.0
        %v1405 = vadd.f32 %v1401, 1.0
        %v1406 = vrcp.pop %v1402
        %v1407 = vmul.f32 1.0, %v1406
        %v1408 = vrcp.pop %v1403
        %v1409 = vmul.f32 1.0, %v1408
        %v1410 = vrcp.pop %v1404
        %v1411 = vmul.f32 1.0, %v1410
        %v1412 = vrcp.pop %v1405
        %v1413 = vmul.f32 1.0, %v1412
        %vm1414 = vcmask 523264
        %1415 = vst.msk [vmem:[%s429] sm:$0xff] %vm1414, %v1407
        %1416 = vst.msk [vmem:[%s429 + $0x8] sm:$0xff] %vm1414, %v1409
        %1417 = vst.msk [vmem:[%s429 + $0x10] sm:$0xff] %vm1414, %v1411
        %1418 = vst.msk [vmem:[%s429 + $0x18] sm:$0xff] %vm1414, %v1413
        %s1419 = smul.u32 4, %s20
        %p1420 = scmp.lt.s32.totalorder %s1419, 7
        %s1421 = scalar_select %p1420, %s1419, 7
        %s1422 = smul.addr %s1421, 8
        %s1423 = scalar_lea.vmem %s9, %s1422
        // Predicated region
        $region95: #{conv_autoencoder_forward.1} parent=89 // pred_check
          %p1424 = pneg %p232
        $region96: #{conv_autoencoder_forward.1} parent=89 // pred_check_branch
          %1426 = sbr.rel (%p1424) target = $region98
        $region97: #{conv_autoencoder_forward.1} parent=89 // pred_region
          %s1427 = smul.u32 4, %s20
        $region98: #{conv_autoencoder_forward.1} parent=89 // pred_fallthru
          _
      $region90: #{conv_autoencoder_forward.1} parent=5 // pred_fallthru
        _
      %p1428 = scmp.le.s32.totalorder 2, %s15
      // Predicated region
      $region99: #{conv_autoencoder_forward.1} parent=5 // pred_check
        %p1429 = pneg %p1428
      $region100: #{conv_autoencoder_forward.1} parent=5 // pred_check_branch
        %1431 = sbr.rel (%p1429) target = $region102
      $region101: #{conv_autoencoder_forward.1} parent=5 // pred_region
        %s1432 = ssub.s32 %s15, 2
        // Predicated region
        $region103: #{conv_autoencoder_forward.1} parent=101 // pred_check
          %p1433 = pneg %p238
        $region104: #{conv_autoencoder_forward.1} parent=101 // pred_check_branch
          %1435 = sbr.rel (%p1433) target = $region106
        $region105: #{conv_autoencoder_forward.1} parent=101 // pred_region
          %s1436 = smul.u32 4, %s21
          %p1437 = scmp.lt.s32.totalorder %s1436, 7
          %s1438 = scalar_select %p1437, %s1436, 7
          %s1439 = smul.addr %s1438, 8
          %s1440 = scalar_lea.vmem %s9, %s1439
        $region106: #{conv_autoencoder_forward.1} parent=101 // pred_fallthru
          _
      $region102: #{conv_autoencoder_forward.1} parent=5 // pred_fallthru
        _
    $region6: #{conv_autoencoder_forward.1} parent=1 // loop_footer
      %s19 = sadd.s32 1, %s15
    $region7: #{conv_autoencoder_forward.1} parent=1 // loop_footer_branch
      %14 = sbr.rel target = $region3
    $region8: #{conv_autoencoder_forward.1} parent=1 // loop_exit
      _

</llo_original>
